<compile_context>
chip_gen: v7x
topology: tpu7x:2x2x1
jax: 0.10.0
libtpu: 0.0.40
codegen_flags: <defaults>
</compile_context>

<pallas_src>
import functools

import jax
import jax.numpy as jnp
from jax.experimental import pallas as pl
from jax.experimental.pallas import tpu as pltpu


def conv1d_lrelu_kernel(x_ref, w_ref, b_ref, o_ref, *, K, dilation, neg_slope, cast_bf16):
    """One grid step = B_blk samples, NCL layout (channels on sublanes, L on lanes).

    x_ref: (B_blk, C_in, L_pad)   spatially pre-padded input, native NCL layout
    w_ref: (K, C_out, C_in)       per-tap weights (block-diagonal across groups)
    b_ref: (C_out, 1)
    o_ref: (B_blk, C_out, L_out)
    """
    B_blk = o_ref.shape[0]
    L_out = o_ref.shape[2]

    # Weights / bias are grid-invariant (constant index_map) -> loaded once, stay resident.
    w = w_ref[...]                                      # (K, C_out, C_in)
    if cast_bf16:
        w = w.astype(jnp.bfloat16)
    bias = b_ref[...]                                   # (C_out, 1)

    for b in range(B_blk):                              # static unroll over the batch block
        x_b = x_ref[b]                                  # (C_in, L_pad)
        if cast_bf16:
            x_b = x_b.astype(jnp.bfloat16)
        acc = None
        for k in range(K):                              # accumulate K per-tap matmuls
            lo = k * dilation                           # static offsets -> static slices
            xk = x_b[:, lo:lo + L_out]                  # (C_in, L_out)
            part = jnp.dot(w[k], xk, preferred_element_type=jnp.float32)  # (C_out, L_out)
            acc = part if acc is None else acc + part
        y = acc + bias                                  # fused bias
        y = jnp.maximum(y, neg_slope * y)               # LeakyReLU(0.2): vmul + vmax
        o_ref[b, :, :] = y.astype(o_ref.dtype)


def _num_tensorcores():
    """Best-effort TensorCore count (2 on megacore/v7x-class parts, 1 on v5e/v6e)."""
    try:
        n = getattr(jax.devices()[0], "num_cores", None)
        if isinstance(n, int) and n > 0:
            return n
    except Exception:
        pass
    return 1


def _pick_batch_block(B, C_in, C_out, L_pad, L_out, *, itemsize=4,
                      vmem_budget_bytes=12 * 1024 * 1024, num_cores=1):
    """Largest divisor of B whose (double-buffered) in/out blocks fit the VMEM budget."""
    def step_bytes(bb):
        # double-buffered activation + output blocks; weights/bias are grid-invariant
        return 2 * itemsize * bb * (C_in * L_pad + C_out * L_out)

    best = 1
    for d in range(1, B + 1):
        if B % d == 0 and step_bytes(d) <= vmem_budget_bytes:
            best = d
    # Only trade block size for extra grid steps when there are >= 2 TensorCores to feed.
    while num_cores > 1 and (B // best) < num_cores and best % 2 == 0:
        best //= 2
    return best


def conv1d_leaky_relu(x, w, b, *, dilation=1, padding=0, groups=1,
                      negative_slope=0.2, use_bf16_operands=None):
    """Forward of the PyTorch `Conv` module.
    x: (B, C_in, L), w: (C_out, C_in//groups, K), b: (C_out,).  Returns (B, C_out, L_out)."""
    B, C_in, L = x.shape
    C_out, C_in_g, K = w.shape
    assert C_in % groups == 0 and C_out % groups == 0
    assert C_in_g == C_in // groups
    C_out_g = C_out // groups
    L_out = L + 2 * padding - dilation * (K - 1)        # stride = 1 (module default)
    assert L_out > 0, "output length must be positive"
    L_pad = L + 2 * padding

    # One-off, cheap wrapper prep: spatial zero-pad only (NO layout transposes).
    x_pad = jnp.pad(x, ((0, 0), (0, 0), (padding, padding)))   # (B, C_in, L_pad)

    # Per-tap weights, block-diagonal across groups: (K, C_out, C_in).
    if groups == 1:
        w_taps = jnp.transpose(w, (2, 0, 1))                    # (K, C_out, C_in)
    else:
        w_taps = jnp.zeros((K, C_out, C_in), w.dtype)
        for g in range(groups):
            w_taps = w_taps.at[:, g * C_out_g:(g + 1) * C_out_g,
                               g * C_in_g:(g + 1) * C_in_g].set(
                jnp.transpose(w[g * C_out_g:(g + 1) * C_out_g], (2, 0, 1)))
    b2 = b.reshape(C_out, 1)

    # bf16 MXU operands only once the contraction is big enough to matter (f32 accumulate).
    if use_bf16_operands is None:
        use_bf16_operands = (C_in_g >= 128) and (L_out >= 128) and (x.dtype == jnp.float32)

    num_cores = _num_tensorcores()
    b_blk = _pick_batch_block(B, C_in, C_out, L_pad, L_out,
                              itemsize=x.dtype.itemsize, num_cores=num_cores)
    grid = (B // b_blk,)

    kernel = functools.partial(
        conv1d_lrelu_kernel, K=K, dilation=dilation,
        neg_slope=negative_slope, cast_bf16=use_bf16_operands,
    )

    out = pl.pallas_call(
        kernel,
        out_shape=jax.ShapeDtypeStruct((B, C_out, L_out), x.dtype),
        grid=grid,
        in_specs=[
            pl.BlockSpec((b_blk, C_in, L_pad), lambda i: (i, 0, 0)),     # activations (NCL)
            pl.BlockSpec((K, C_out, C_in), lambda i: (0, 0, 0)),         # weights (resident)
            pl.BlockSpec((C_out, 1), lambda i: (0, 0)),                  # bias (resident)
        ],
        out_specs=pl.BlockSpec((b_blk, C_out, L_out), lambda i: (i, 0, 0)),
        compiler_params=pltpu.CompilerParams(
            dimension_semantics=("parallel",),
            vmem_limit_bytes=32 * 1024 * 1024,
        ),
    )(x_pad, w_taps, b2)

    return out


def _reference(x, w, b, *, dilation, padding, groups, negative_slope=0.2):
    """Pure-JAX reference mirroring nn.Conv1d(...) + LeakyReLU(0.2)."""
    y = jax.lax.conv_general_dilated(
        x, w,
        window_strides=(1,),
        padding=[(padding, padding)],
        rhs_dilation=(dilation,),
        dimension_numbers=("NCH", "OIH", "NCH"),
        feature_group_count=groups,
    ) + b[None, :, None]
    return jnp.where(y >= 0, y, negative_slope * y)


if __name__ == "__main__":
    key = jax.random.PRNGKey(0)

    # --- config 1: dilated conv, groups=1 (small shapes consistent with the module) ---
    B, C_in, L = 8, 8, 16
    C_out, K = 16, 3
    dilation, padding, groups = 2, 2, 1

    k1, k2, k3 = jax.random.split(key, 3)
    fan_in = (C_in // groups) * K
    bound = 1.0 / (fan_in ** 0.5)
    w = jax.random.uniform(k1, (C_out, C_in // groups, K), jnp.float32, -bound, bound)
    b = jax.random.uniform(k2, (C_out,), jnp.float32, -bound, bound)
    x = jax.random.normal(k3, (B, C_in, L), jnp.float32)

    y = conv1d_leaky_relu(x, w, b, dilation=dilation, padding=padding, groups=groups)
    jax.block_until_ready(y)
    y_ref = _reference(x, w, b, dilation=dilation, padding=padding, groups=groups)
    assert y.shape == y_ref.shape, (y.shape, y_ref.shape)
    assert jnp.allclose(y, y_ref, rtol=1e-3, atol=1e-3), "mismatch vs reference (groups=1)"

    # --- config 2: grouped conv (exercises the block-diagonal per-tap weights) ---
    B2, C_in2, L2 = 4, 8, 32
    C_out2, K2 = 8, 3
    dil2, pad2, grp2 = 1, 1, 2

    k4, k5, k6 = jax.random.split(k3, 3)
    bound2 = 1.0 / (((C_in2 // grp2) * K2) ** 0.5)
    w2 = jax.random.uniform(k4, (C_out2, C_in2 // grp2, K2), jnp.float32, -bound2, bound2)
    b2v = jax.random.uniform(k5, (C_out2,), jnp.float32, -bound2, bound2)
    x2 = jax.random.normal(k6, (B2, C_in2, L2), jnp.float32)

    y2 = conv1d_leaky_relu(x2, w2, b2v, dilation=dil2, padding=pad2, groups=grp2)
    jax.block_until_ready(y2)
    y2_ref = _reference(x2, w2, b2v, dilation=dil2, padding=pad2, groups=grp2)
    assert y2.shape == y2_ref.shape, (y2.shape, y2_ref.shape)
    assert jnp.allclose(y2, y2_ref, rtol=1e-3, atol=1e-3), "mismatch vs reference (groups=2)"

    print("KERNEL_OK")
</pallas_src>

<mosaic_0001>
module attributes {stable_mosaic.version = 11 : i64} {
  func.func @conv1d_lrelu_kernel(%arg0: i32, %arg1: memref<8x8x20xf32, #tpu.memory_space<vmem>>, %arg2: memref<3x16x8xf32, #tpu.memory_space<vmem>>, %arg3: memref<16x1xf32, #tpu.memory_space<vmem>>, %arg4: memref<8x16x16xf32, #tpu.memory_space<vmem>>) attributes {dimension_semantics = [#tpu.dimension_semantics<parallel>], iteration_bounds = array<i64: 1>, scalar_prefetch = 0 : i64, scratch_operands = 0 : i64, tpu.core_type = #tpu.core_type<tc>, window_params = [{transform_indices = @transform_0, window_bounds = array<i64: 8, 8, 20>}, {pipeline_mode = #tpu.pipeline_mode<synchronous>, transform_indices = @transform_1, window_bounds = array<i64: 3, 16, 8>}, {pipeline_mode = #tpu.pipeline_mode<synchronous>, transform_indices = @transform_2, window_bounds = array<i64: 16, 1>}, {transform_indices = @transform_3, window_bounds = array<i64: 8, 16, 16>}]} {
    %c0 = arith.constant 0 : index
    %c0_0 = arith.constant 0 : index
    %c0_1 = arith.constant 0 : index
    %0 = vector.load %arg2[%c0, %c0_0, %c0_1] : memref<3x16x8xf32, #tpu.memory_space<vmem>>, vector<3x16x8xf32>
    %c0_2 = arith.constant 0 : index
    %c0_3 = arith.constant 0 : index
    %1 = vector.load %arg3[%c0_2, %c0_3] : memref<16x1xf32, #tpu.memory_space<vmem>>, vector<16x1xf32>
    %c0_4 = arith.constant 0 : index
    %c0_5 = arith.constant 0 : index
    %c0_6 = arith.constant 0 : index
    %2 = vector.load %arg1[%c0_4, %c0_5, %c0_6] : memref<8x8x20xf32, #tpu.memory_space<vmem>>, vector<1x8x20xf32>
    %3 = vector.shape_cast %2 : vector<1x8x20xf32> to vector<8x20xf32>
    %4 = vector.extract_strided_slice %3 {offsets = [0, 0], sizes = [8, 16], strides = [1, 1]} : vector<8x20xf32> to vector<8x16xf32>
    %5 = vector.extract_strided_slice %0 {offsets = [0, 0, 0], sizes = [1, 16, 8], strides = [1, 1, 1]} : vector<3x16x8xf32> to vector<1x16x8xf32>
    %6 = vector.shape_cast %5 : vector<1x16x8xf32> to vector<16x8xf32>
    %cst = arith.constant dense<0.000000e+00> : vector<16x16xf32>
    %7 = tpu.matmul %6, %4, %cst {dimension_numbers = #tpu.dot_dimension_numbers<[1], [0], [0], [1], [0, 0, 1, 1], [], []>} : vector<16x8xf32>, vector<8x16xf32>, vector<16x16xf32> -> vector<16x16xf32>
    %8 = vector.extract_strided_slice %3 {offsets = [0, 2], sizes = [8, 16], strides = [1, 1]} : vector<8x20xf32> to vector<8x16xf32>
    %9 = vector.extract_strided_slice %0 {offsets = [1, 0, 0], sizes = [1, 16, 8], strides = [1, 1, 1]} : vector<3x16x8xf32> to vector<1x16x8xf32>
    %10 = vector.shape_cast %9 : vector<1x16x8xf32> to vector<16x8xf32>
    %cst_7 = arith.constant dense<0.000000e+00> : vector<16x16xf32>
    %11 = tpu.matmul %10, %8, %cst_7 {dimension_numbers = #tpu.dot_dimension_numbers<[1], [0], [0], [1], [0, 0, 1, 1], [], []>} : vector<16x8xf32>, vector<8x16xf32>, vector<16x16xf32> -> vector<16x16xf32>
    %12 = arith.addf %7, %11 : vector<16x16xf32>
    %13 = vector.extract_strided_slice %3 {offsets = [0, 4], sizes = [8, 16], strides = [1, 1]} : vector<8x20xf32> to vector<8x16xf32>
    %14 = vector.extract_strided_slice %0 {offsets = [2, 0, 0], sizes = [1, 16, 8], strides = [1, 1, 1]} : vector<3x16x8xf32> to vector<1x16x8xf32>
    %15 = vector.shape_cast %14 : vector<1x16x8xf32> to vector<16x8xf32>
    %cst_8 = arith.constant dense<0.000000e+00> : vector<16x16xf32>
    %16 = tpu.matmul %15, %13, %cst_8 {dimension_numbers = #tpu.dot_dimension_numbers<[1], [0], [0], [1], [0, 0, 1, 1], [], []>} : vector<16x8xf32>, vector<8x16xf32>, vector<16x16xf32> -> vector<16x16xf32>
    %17 = arith.addf %12, %16 : vector<16x16xf32>
    %18 = vector.broadcast %1 : vector<16x1xf32> to vector<16x16xf32>
    %19 = arith.addf %17, %18 : vector<16x16xf32>
    %cst_9 = arith.constant 2.000000e-01 : f32
    %20 = vector.broadcast %cst_9 : f32 to vector<16x16xf32>
    %21 = arith.mulf %20, %19 : vector<16x16xf32>
    %22 = arith.maximumf %19, %21 : vector<16x16xf32>
    %c0_10 = arith.constant 0 : index
    %c0_11 = arith.constant 0 : index
    %c0_12 = arith.constant 0 : index
    %23 = vector.load %arg4[%c0_10, %c0_11, %c0_12] : memref<8x16x16xf32, #tpu.memory_space<vmem>>, vector<1x16x16xf32>
    %24 = vector.shape_cast %23 : vector<1x16x16xf32> to vector<16x16xf32>
    %25 = vector.shape_cast %22 : vector<16x16xf32> to vector<1x16x16xf32>
    tpu.vector_store %arg4[%c0_10, %c0_11, %c0_12], %25 {strides = array<i32>} : memref<8x16x16xf32, #tpu.memory_space<vmem>>, vector<1x16x16xf32>,
    %c1 = arith.constant 1 : index
    %c0_13 = arith.constant 0 : index
    %c0_14 = arith.constant 0 : index
    %26 = vector.load %arg1[%c1, %c0_13, %c0_14] : memref<8x8x20xf32, #tpu.memory_space<vmem>>, vector<1x8x20xf32>
    %27 = vector.shape_cast %26 : vector<1x8x20xf32> to vector<8x20xf32>
    %28 = vector.extract_strided_slice %27 {offsets = [0, 0], sizes = [8, 16], strides = [1, 1]} : vector<8x20xf32> to vector<8x16xf32>
    %29 = vector.extract_strided_slice %0 {offsets = [0, 0, 0], sizes = [1, 16, 8], strides = [1, 1, 1]} : vector<3x16x8xf32> to vector<1x16x8xf32>
    %30 = vector.shape_cast %29 : vector<1x16x8xf32> to vector<16x8xf32>
    %cst_15 = arith.constant dense<0.000000e+00> : vector<16x16xf32>
    %31 = tpu.matmul %30, %28, %cst_15 {dimension_numbers = #tpu.dot_dimension_numbers<[1], [0], [0], [1], [0, 0, 1, 1], [], []>} : vector<16x8xf32>, vector<8x16xf32>, vector<16x16xf32> -> vector<16x16xf32>
    %32 = vector.extract_strided_slice %27 {offsets = [0, 2], sizes = [8, 16], strides = [1, 1]} : vector<8x20xf32> to vector<8x16xf32>
    %33 = vector.extract_strided_slice %0 {offsets = [1, 0, 0], sizes = [1, 16, 8], strides = [1, 1, 1]} : vector<3x16x8xf32> to vector<1x16x8xf32>
    %34 = vector.shape_cast %33 : vector<1x16x8xf32> to vector<16x8xf32>
    %cst_16 = arith.constant dense<0.000000e+00> : vector<16x16xf32>
    %35 = tpu.matmul %34, %32, %cst_16 {dimension_numbers = #tpu.dot_dimension_numbers<[1], [0], [0], [1], [0, 0, 1, 1], [], []>} : vector<16x8xf32>, vector<8x16xf32>, vector<16x16xf32> -> vector<16x16xf32>
    %36 = arith.addf %31, %35 : vector<16x16xf32>
    %37 = vector.extract_strided_slice %27 {offsets = [0, 4], sizes = [8, 16], strides = [1, 1]} : vector<8x20xf32> to vector<8x16xf32>
    %38 = vector.extract_strided_slice %0 {offsets = [2, 0, 0], sizes = [1, 16, 8], strides = [1, 1, 1]} : vector<3x16x8xf32> to vector<1x16x8xf32>
    %39 = vector.shape_cast %38 : vector<1x16x8xf32> to vector<16x8xf32>
    %cst_17 = arith.constant dense<0.000000e+00> : vector<16x16xf32>
    %40 = tpu.matmul %39, %37, %cst_17 {dimension_numbers = #tpu.dot_dimension_numbers<[1], [0], [0], [1], [0, 0, 1, 1], [], []>} : vector<16x8xf32>, vector<8x16xf32>, vector<16x16xf32> -> vector<16x16xf32>
    %41 = arith.addf %36, %40 : vector<16x16xf32>
    %42 = vector.broadcast %1 : vector<16x1xf32> to vector<16x16xf32>
    %43 = arith.addf %41, %42 : vector<16x16xf32>
    %cst_18 = arith.constant 2.000000e-01 : f32
    %44 = vector.broadcast %cst_18 : f32 to vector<16x16xf32>
    %45 = arith.mulf %44, %43 : vector<16x16xf32>
    %46 = arith.maximumf %43, %45 : vector<16x16xf32>
    %c1_19 = arith.constant 1 : index
    %c0_20 = arith.constant 0 : index
    %c0_21 = arith.constant 0 : index
    %47 = vector.load %arg4[%c1_19, %c0_20, %c0_21] : memref<8x16x16xf32, #tpu.memory_space<vmem>>, vector<1x16x16xf32>
    %48 = vector.shape_cast %47 : vector<1x16x16xf32> to vector<16x16xf32>
    %49 = vector.shape_cast %46 : vector<16x16xf32> to vector<1x16x16xf32>
    tpu.vector_store %arg4[%c1_19, %c0_20, %c0_21], %49 {strides = array<i32>} : memref<8x16x16xf32, #tpu.memory_space<vmem>>, vector<1x16x16xf32>,
    %c2 = arith.constant 2 : index
    %c0_22 = arith.constant 0 : index
    %c0_23 = arith.constant 0 : index
    %50 = vector.load %arg1[%c2, %c0_22, %c0_23] : memref<8x8x20xf32, #tpu.memory_space<vmem>>, vector<1x8x20xf32>
    %51 = vector.shape_cast %50 : vector<1x8x20xf32> to vector<8x20xf32>
    %52 = vector.extract_strided_slice %51 {offsets = [0, 0], sizes = [8, 16], strides = [1, 1]} : vector<8x20xf32> to vector<8x16xf32>
    %53 = vector.extract_strided_slice %0 {offsets = [0, 0, 0], sizes = [1, 16, 8], strides = [1, 1, 1]} : vector<3x16x8xf32> to vector<1x16x8xf32>
    %54 = vector.shape_cast %53 : vector<1x16x8xf32> to vector<16x8xf32>
    %cst_24 = arith.constant dense<0.000000e+00> : vector<16x16xf32>
    %55 = tpu.matmul %54, %52, %cst_24 {dimension_numbers = #tpu.dot_dimension_numbers<[1], [0], [0], [1], [0, 0, 1, 1], [], []>} : vector<16x8xf32>, vector<8x16xf32>, vector<16x16xf32> -> vector<16x16xf32>
    %56 = vector.extract_strided_slice %51 {offsets = [0, 2], sizes = [8, 16], strides = [1, 1]} : vector<8x20xf32> to vector<8x16xf32>
    %57 = vector.extract_strided_slice %0 {offsets = [1, 0, 0], sizes = [1, 16, 8], strides = [1, 1, 1]} : vector<3x16x8xf32> to vector<1x16x8xf32>
    %58 = vector.shape_cast %57 : vector<1x16x8xf32> to vector<16x8xf32>
    %cst_25 = arith.constant dense<0.000000e+00> : vector<16x16xf32>
    %59 = tpu.matmul %58, %56, %cst_25 {dimension_numbers = #tpu.dot_dimension_numbers<[1], [0], [0], [1], [0, 0, 1, 1], [], []>} : vector<16x8xf32>, vector<8x16xf32>, vector<16x16xf32> -> vector<16x16xf32>
    %60 = arith.addf %55, %59 : vector<16x16xf32>
    %61 = vector.extract_strided_slice %51 {offsets = [0, 4], sizes = [8, 16], strides = [1, 1]} : vector<8x20xf32> to vector<8x16xf32>
    %62 = vector.extract_strided_slice %0 {offsets = [2, 0, 0], sizes = [1, 16, 8], strides = [1, 1, 1]} : vector<3x16x8xf32> to vector<1x16x8xf32>
    %63 = vector.shape_cast %62 : vector<1x16x8xf32> to vector<16x8xf32>
    %cst_26 = arith.constant dense<0.000000e+00> : vector<16x16xf32>
    %64 = tpu.matmul %63, %61, %cst_26 {dimension_numbers = #tpu.dot_dimension_numbers<[1], [0], [0], [1], [0, 0, 1, 1], [], []>} : vector<16x8xf32>, vector<8x16xf32>, vector<16x16xf32> -> vector<16x16xf32>
    %65 = arith.addf %60, %64 : vector<16x16xf32>
    %66 = vector.broadcast %1 : vector<16x1xf32> to vector<16x16xf32>
    %67 = arith.addf %65, %66 : vector<16x16xf32>
    %cst_27 = arith.constant 2.000000e-01 : f32
    %68 = vector.broadcast %cst_27 : f32 to vector<16x16xf32>
    %69 = arith.mulf %68, %67 : vector<16x16xf32>
    %70 = arith.maximumf %67, %69 : vector<16x16xf32>
    %c2_28 = arith.constant 2 : index
    %c0_29 = arith.constant 0 : index
    %c0_30 = arith.constant 0 : index
    %71 = vector.load %arg4[%c2_28, %c0_29, %c0_30] : memref<8x16x16xf32, #tpu.memory_space<vmem>>, vector<1x16x16xf32>
    %72 = vector.shape_cast %71 : vector<1x16x16xf32> to vector<16x16xf32>
    %73 = vector.shape_cast %70 : vector<16x16xf32> to vector<1x16x16xf32>
    tpu.vector_store %arg4[%c2_28, %c0_29, %c0_30], %73 {strides = array<i32>} : memref<8x16x16xf32, #tpu.memory_space<vmem>>, vector<1x16x16xf32>,
    %c3 = arith.constant 3 : index
    %c0_31 = arith.constant 0 : index
    %c0_32 = arith.constant 0 : index
    %74 = vector.load %arg1[%c3, %c0_31, %c0_32] : memref<8x8x20xf32, #tpu.memory_space<vmem>>, vector<1x8x20xf32>
    %75 = vector.shape_cast %74 : vector<1x8x20xf32> to vector<8x20xf32>
    %76 = vector.extract_strided_slice %75 {offsets = [0, 0], sizes = [8, 16], strides = [1, 1]} : vector<8x20xf32> to vector<8x16xf32>
    %77 = vector.extract_strided_slice %0 {offsets = [0, 0, 0], sizes = [1, 16, 8], strides = [1, 1, 1]} : vector<3x16x8xf32> to vector<1x16x8xf32>
    %78 = vector.shape_cast %77 : vector<1x16x8xf32> to vector<16x8xf32>
    %cst_33 = arith.constant dense<0.000000e+00> : vector<16x16xf32>
    %79 = tpu.matmul %78, %76, %cst_33 {dimension_numbers = #tpu.dot_dimension_numbers<[1], [0], [0], [1], [0, 0, 1, 1], [], []>} : vector<16x8xf32>, vector<8x16xf32>, vector<16x16xf32> -> vector<16x16xf32>
    %80 = vector.extract_strided_slice %75 {offsets = [0, 2], sizes = [8, 16], strides = [1, 1]} : vector<8x20xf32> to vector<8x16xf32>
    %81 = vector.extract_strided_slice %0 {offsets = [1, 0, 0], sizes = [1, 16, 8], strides = [1, 1, 1]} : vector<3x16x8xf32> to vector<1x16x8xf32>
    %82 = vector.shape_cast %81 : vector<1x16x8xf32> to vector<16x8xf32>
    %cst_34 = arith.constant dense<0.000000e+00> : vector<16x16xf32>
    %83 = tpu.matmul %82, %80, %cst_34 {dimension_numbers = #tpu.dot_dimension_numbers<[1], [0], [0], [1], [0, 0, 1, 1], [], []>} : vector<16x8xf32>, vector<8x16xf32>, vector<16x16xf32> -> vector<16x16xf32>
    %84 = arith.addf %79, %83 : vector<16x16xf32>
    %85 = vector.extract_strided_slice %75 {offsets = [0, 4], sizes = [8, 16], strides = [1, 1]} : vector<8x20xf32> to vector<8x16xf32>
    %86 = vector.extract_strided_slice %0 {offsets = [2, 0, 0], sizes = [1, 16, 8], strides = [1, 1, 1]} : vector<3x16x8xf32> to vector<1x16x8xf32>
    %87 = vector.shape_cast %86 : vector<1x16x8xf32> to vector<16x8xf32>
    %cst_35 = arith.constant dense<0.000000e+00> : vector<16x16xf32>
    %88 = tpu.matmul %87, %85, %cst_35 {dimension_numbers = #tpu.dot_dimension_numbers<[1], [0], [0], [1], [0, 0, 1, 1], [], []>} : vector<16x8xf32>, vector<8x16xf32>, vector<16x16xf32> -> vector<16x16xf32>
    %89 = arith.addf %84, %88 : vector<16x16xf32>
    %90 = vector.broadcast %1 : vector<16x1xf32> to vector<16x16xf32>
    %91 = arith.addf %89, %90 : vector<16x16xf32>
    %cst_36 = arith.constant 2.000000e-01 : f32
    %92 = vector.broadcast %cst_36 : f32 to vector<16x16xf32>
    %93 = arith.mulf %92, %91 : vector<16x16xf32>
    %94 = arith.maximumf %91, %93 : vector<16x16xf32>
    %c3_37 = arith.constant 3 : index
    %c0_38 = arith.constant 0 : index
    %c0_39 = arith.constant 0 : index
    %95 = vector.load %arg4[%c3_37, %c0_38, %c0_39] : memref<8x16x16xf32, #tpu.memory_space<vmem>>, vector<1x16x16xf32>
    %96 = vector.shape_cast %95 : vector<1x16x16xf32> to vector<16x16xf32>
    %97 = vector.shape_cast %94 : vector<16x16xf32> to vector<1x16x16xf32>
    tpu.vector_store %arg4[%c3_37, %c0_38, %c0_39], %97 {strides = array<i32>} : memref<8x16x16xf32, #tpu.memory_space<vmem>>, vector<1x16x16xf32>,
    %c4 = arith.constant 4 : index
    %c0_40 = arith.constant 0 : index
    %c0_41 = arith.constant 0 : index
    %98 = vector.load %arg1[%c4, %c0_40, %c0_41] : memref<8x8x20xf32, #tpu.memory_space<vmem>>, vector<1x8x20xf32>
    %99 = vector.shape_cast %98 : vector<1x8x20xf32> to vector<8x20xf32>
    %100 = vector.extract_strided_slice %99 {offsets = [0, 0], sizes = [8, 16], strides = [1, 1]} : vector<8x20xf32> to vector<8x16xf32>
    %101 = vector.extract_strided_slice %0 {offsets = [0, 0, 0], sizes = [1, 16, 8], strides = [1, 1, 1]} : vector<3x16x8xf32> to vector<1x16x8xf32>
    %102 = vector.shape_cast %101 : vector<1x16x8xf32> to vector<16x8xf32>
    %cst_42 = arith.constant dense<0.000000e+00> : vector<16x16xf32>
    %103 = tpu.matmul %102, %100, %cst_42 {dimension_numbers = #tpu.dot_dimension_numbers<[1], [0], [0], [1], [0, 0, 1, 1], [], []>} : vector<16x8xf32>, vector<8x16xf32>, vector<16x16xf32> -> vector<16x16xf32>
    %104 = vector.extract_strided_slice %99 {offsets = [0, 2], sizes = [8, 16], strides = [1, 1]} : vector<8x20xf32> to vector<8x16xf32>
    %105 = vector.extract_strided_slice %0 {offsets = [1, 0, 0], sizes = [1, 16, 8], strides = [1, 1, 1]} : vector<3x16x8xf32> to vector<1x16x8xf32>
    %106 = vector.shape_cast %105 : vector<1x16x8xf32> to vector<16x8xf32>
    %cst_43 = arith.constant dense<0.000000e+00> : vector<16x16xf32>
    %107 = tpu.matmul %106, %104, %cst_43 {dimension_numbers = #tpu.dot_dimension_numbers<[1], [0], [0], [1], [0, 0, 1, 1], [], []>} : vector<16x8xf32>, vector<8x16xf32>, vector<16x16xf32> -> vector<16x16xf32>
    %108 = arith.addf %103, %107 : vector<16x16xf32>
    %109 = vector.extract_strided_slice %99 {offsets = [0, 4], sizes = [8, 16], strides = [1, 1]} : vector<8x20xf32> to vector<8x16xf32>
    %110 = vector.extract_strided_slice %0 {offsets = [2, 0, 0], sizes = [1, 16, 8], strides = [1, 1, 1]} : vector<3x16x8xf32> to vector<1x16x8xf32>
    %111 = vector.shape_cast %110 : vector<1x16x8xf32> to vector<16x8xf32>
    %cst_44 = arith.constant dense<0.000000e+00> : vector<16x16xf32>
    %112 = tpu.matmul %111, %109, %cst_44 {dimension_numbers = #tpu.dot_dimension_numbers<[1], [0], [0], [1], [0, 0, 1, 1], [], []>} : vector<16x8xf32>, vector<8x16xf32>, vector<16x16xf32> -> vector<16x16xf32>
    %113 = arith.addf %108, %112 : vector<16x16xf32>
    %114 = vector.broadcast %1 : vector<16x1xf32> to vector<16x16xf32>
    %115 = arith.addf %113, %114 : vector<16x16xf32>
    %cst_45 = arith.constant 2.000000e-01 : f32
    %116 = vector.broadcast %cst_45 : f32 to vector<16x16xf32>
    %117 = arith.mulf %116, %115 : vector<16x16xf32>
    %118 = arith.maximumf %115, %117 : vector<16x16xf32>
    %c4_46 = arith.constant 4 : index
    %c0_47 = arith.constant 0 : index
    %c0_48 = arith.constant 0 : index
    %119 = vector.load %arg4[%c4_46, %c0_47, %c0_48] : memref<8x16x16xf32, #tpu.memory_space<vmem>>, vector<1x16x16xf32>
    %120 = vector.shape_cast %119 : vector<1x16x16xf32> to vector<16x16xf32>
    %121 = vector.shape_cast %118 : vector<16x16xf32> to vector<1x16x16xf32>
    tpu.vector_store %arg4[%c4_46, %c0_47, %c0_48], %121 {strides = array<i32>} : memref<8x16x16xf32, #tpu.memory_space<vmem>>, vector<1x16x16xf32>,
    %c5 = arith.constant 5 : index
    %c0_49 = arith.constant 0 : index
    %c0_50 = arith.constant 0 : index
    %122 = vector.load %arg1[%c5, %c0_49, %c0_50] : memref<8x8x20xf32, #tpu.memory_space<vmem>>, vector<1x8x20xf32>
    %123 = vector.shape_cast %122 : vector<1x8x20xf32> to vector<8x20xf32>
    %124 = vector.extract_strided_slice %123 {offsets = [0, 0], sizes = [8, 16], strides = [1, 1]} : vector<8x20xf32> to vector<8x16xf32>
    %125 = vector.extract_strided_slice %0 {offsets = [0, 0, 0], sizes = [1, 16, 8], strides = [1, 1, 1]} : vector<3x16x8xf32> to vector<1x16x8xf32>
    %126 = vector.shape_cast %125 : vector<1x16x8xf32> to vector<16x8xf32>
    %cst_51 = arith.constant dense<0.000000e+00> : vector<16x16xf32>
    %127 = tpu.matmul %126, %124, %cst_51 {dimension_numbers = #tpu.dot_dimension_numbers<[1], [0], [0], [1], [0, 0, 1, 1], [], []>} : vector<16x8xf32>, vector<8x16xf32>, vector<16x16xf32> -> vector<16x16xf32>
    %128 = vector.extract_strided_slice %123 {offsets = [0, 2], sizes = [8, 16], strides = [1, 1]} : vector<8x20xf32> to vector<8x16xf32>
    %129 = vector.extract_strided_slice %0 {offsets = [1, 0, 0], sizes = [1, 16, 8], strides = [1, 1, 1]} : vector<3x16x8xf32> to vector<1x16x8xf32>
    %130 = vector.shape_cast %129 : vector<1x16x8xf32> to vector<16x8xf32>
    %cst_52 = arith.constant dense<0.000000e+00> : vector<16x16xf32>
    %131 = tpu.matmul %130, %128, %cst_52 {dimension_numbers = #tpu.dot_dimension_numbers<[1], [0], [0], [1], [0, 0, 1, 1], [], []>} : vector<16x8xf32>, vector<8x16xf32>, vector<16x16xf32> -> vector<16x16xf32>
    %132 = arith.addf %127, %131 : vector<16x16xf32>
    %133 = vector.extract_strided_slice %123 {offsets = [0, 4], sizes = [8, 16], strides = [1, 1]} : vector<8x20xf32> to vector<8x16xf32>
    %134 = vector.extract_strided_slice %0 {offsets = [2, 0, 0], sizes = [1, 16, 8], strides = [1, 1, 1]} : vector<3x16x8xf32> to vector<1x16x8xf32>
    %135 = vector.shape_cast %134 : vector<1x16x8xf32> to vector<16x8xf32>
    %cst_53 = arith.constant dense<0.000000e+00> : vector<16x16xf32>
    %136 = tpu.matmul %135, %133, %cst_53 {dimension_numbers = #tpu.dot_dimension_numbers<[1], [0], [0], [1], [0, 0, 1, 1], [], []>} : vector<16x8xf32>, vector<8x16xf32>, vector<16x16xf32> -> vector<16x16xf32>
    %137 = arith.addf %132, %136 : vector<16x16xf32>
    %138 = vector.broadcast %1 : vector<16x1xf32> to vector<16x16xf32>
    %139 = arith.addf %137, %138 : vector<16x16xf32>
    %cst_54 = arith.constant 2.000000e-01 : f32
    %140 = vector.broadcast %cst_54 : f32 to vector<16x16xf32>
    %141 = arith.mulf %140, %139 : vector<16x16xf32>
    %142 = arith.maximumf %139, %141 : vector<16x16xf32>
    %c5_55 = arith.constant 5 : index
    %c0_56 = arith.constant 0 : index
    %c0_57 = arith.constant 0 : index
    %143 = vector.load %arg4[%c5_55, %c0_56, %c0_57] : memref<8x16x16xf32, #tpu.memory_space<vmem>>, vector<1x16x16xf32>
    %144 = vector.shape_cast %143 : vector<1x16x16xf32> to vector<16x16xf32>
    %145 = vector.shape_cast %142 : vector<16x16xf32> to vector<1x16x16xf32>
    tpu.vector_store %arg4[%c5_55, %c0_56, %c0_57], %145 {strides = array<i32>} : memref<8x16x16xf32, #tpu.memory_space<vmem>>, vector<1x16x16xf32>,
    %c6 = arith.constant 6 : index
    %c0_58 = arith.constant 0 : index
    %c0_59 = arith.constant 0 : index
    %146 = vector.load %arg1[%c6, %c0_58, %c0_59] : memref<8x8x20xf32, #tpu.memory_space<vmem>>, vector<1x8x20xf32>
    %147 = vector.shape_cast %146 : vector<1x8x20xf32> to vector<8x20xf32>
    %148 = vector.extract_strided_slice %147 {offsets = [0, 0], sizes = [8, 16], strides = [1, 1]} : vector<8x20xf32> to vector<8x16xf32>
    %149 = vector.extract_strided_slice %0 {offsets = [0, 0, 0], sizes = [1, 16, 8], strides = [1, 1, 1]} : vector<3x16x8xf32> to vector<1x16x8xf32>
    %150 = vector.shape_cast %149 : vector<1x16x8xf32> to vector<16x8xf32>
    %cst_60 = arith.constant dense<0.000000e+00> : vector<16x16xf32>
    %151 = tpu.matmul %150, %148, %cst_60 {dimension_numbers = #tpu.dot_dimension_numbers<[1], [0], [0], [1], [0, 0, 1, 1], [], []>} : vector<16x8xf32>, vector<8x16xf32>, vector<16x16xf32> -> vector<16x16xf32>
    %152 = vector.extract_strided_slice %147 {offsets = [0, 2], sizes = [8, 16], strides = [1, 1]} : vector<8x20xf32> to vector<8x16xf32>
    %153 = vector.extract_strided_slice %0 {offsets = [1, 0, 0], sizes = [1, 16, 8], strides = [1, 1, 1]} : vector<3x16x8xf32> to vector<1x16x8xf32>
    %154 = vector.shape_cast %153 : vector<1x16x8xf32> to vector<16x8xf32>
    %cst_61 = arith.constant dense<0.000000e+00> : vector<16x16xf32>
    %155 = tpu.matmul %154, %152, %cst_61 {dimension_numbers = #tpu.dot_dimension_numbers<[1], [0], [0], [1], [0, 0, 1, 1], [], []>} : vector<16x8xf32>, vector<8x16xf32>, vector<16x16xf32> -> vector<16x16xf32>
    %156 = arith.addf %151, %155 : vector<16x16xf32>
    %157 = vector.extract_strided_slice %147 {offsets = [0, 4], sizes = [8, 16], strides = [1, 1]} : vector<8x20xf32> to vector<8x16xf32>
    %158 = vector.extract_strided_slice %0 {offsets = [2, 0, 0], sizes = [1, 16, 8], strides = [1, 1, 1]} : vector<3x16x8xf32> to vector<1x16x8xf32>
    %159 = vector.shape_cast %158 : vector<1x16x8xf32> to vector<16x8xf32>
    %cst_62 = arith.constant dense<0.000000e+00> : vector<16x16xf32>
    %160 = tpu.matmul %159, %157, %cst_62 {dimension_numbers = #tpu.dot_dimension_numbers<[1], [0], [0], [1], [0, 0, 1, 1], [], []>} : vector<16x8xf32>, vector<8x16xf32>, vector<16x16xf32> -> vector<16x16xf32>
    %161 = arith.addf %156, %160 : vector<16x16xf32>
    %162 = vector.broadcast %1 : vector<16x1xf32> to vector<16x16xf32>
    %163 = arith.addf %161, %162 : vector<16x16xf32>
    %cst_63 = arith.constant 2.000000e-01 : f32
    %164 = vector.broadcast %cst_63 : f32 to vector<16x16xf32>
    %165 = arith.mulf %164, %163 : vector<16x16xf32>
    %166 = arith.maximumf %163, %165 : vector<16x16xf32>
    %c6_64 = arith.constant 6 : index
    %c0_65 = arith.constant 0 : index
    %c0_66 = arith.constant 0 : index
    %167 = vector.load %arg4[%c6_64, %c0_65, %c0_66] : memref<8x16x16xf32, #tpu.memory_space<vmem>>, vector<1x16x16xf32>
    %168 = vector.shape_cast %167 : vector<1x16x16xf32> to vector<16x16xf32>
    %169 = vector.shape_cast %166 : vector<16x16xf32> to vector<1x16x16xf32>
    tpu.vector_store %arg4[%c6_64, %c0_65, %c0_66], %169 {strides = array<i32>} : memref<8x16x16xf32, #tpu.memory_space<vmem>>, vector<1x16x16xf32>,
    %c7 = arith.constant 7 : index
    %c0_67 = arith.constant 0 : index
    %c0_68 = arith.constant 0 : index
    %170 = vector.load %arg1[%c7, %c0_67, %c0_68] : memref<8x8x20xf32, #tpu.memory_space<vmem>>, vector<1x8x20xf32>
    %171 = vector.shape_cast %170 : vector<1x8x20xf32> to vector<8x20xf32>
    %172 = vector.extract_strided_slice %171 {offsets = [0, 0], sizes = [8, 16], strides = [1, 1]} : vector<8x20xf32> to vector<8x16xf32>
    %173 = vector.extract_strided_slice %0 {offsets = [0, 0, 0], sizes = [1, 16, 8], strides = [1, 1, 1]} : vector<3x16x8xf32> to vector<1x16x8xf32>
    %174 = vector.shape_cast %173 : vector<1x16x8xf32> to vector<16x8xf32>
    %cst_69 = arith.constant dense<0.000000e+00> : vector<16x16xf32>
    %175 = tpu.matmul %174, %172, %cst_69 {dimension_numbers = #tpu.dot_dimension_numbers<[1], [0], [0], [1], [0, 0, 1, 1], [], []>} : vector<16x8xf32>, vector<8x16xf32>, vector<16x16xf32> -> vector<16x16xf32>
    %176 = vector.extract_strided_slice %171 {offsets = [0, 2], sizes = [8, 16], strides = [1, 1]} : vector<8x20xf32> to vector<8x16xf32>
    %177 = vector.extract_strided_slice %0 {offsets = [1, 0, 0], sizes = [1, 16, 8], strides = [1, 1, 1]} : vector<3x16x8xf32> to vector<1x16x8xf32>
    %178 = vector.shape_cast %177 : vector<1x16x8xf32> to vector<16x8xf32>
    %cst_70 = arith.constant dense<0.000000e+00> : vector<16x16xf32>
    %179 = tpu.matmul %178, %176, %cst_70 {dimension_numbers = #tpu.dot_dimension_numbers<[1], [0], [0], [1], [0, 0, 1, 1], [], []>} : vector<16x8xf32>, vector<8x16xf32>, vector<16x16xf32> -> vector<16x16xf32>
    %180 = arith.addf %175, %179 : vector<16x16xf32>
    %181 = vector.extract_strided_slice %171 {offsets = [0, 4], sizes = [8, 16], strides = [1, 1]} : vector<8x20xf32> to vector<8x16xf32>
    %182 = vector.extract_strided_slice %0 {offsets = [2, 0, 0], sizes = [1, 16, 8], strides = [1, 1, 1]} : vector<3x16x8xf32> to vector<1x16x8xf32>
    %183 = vector.shape_cast %182 : vector<1x16x8xf32> to vector<16x8xf32>
    %cst_71 = arith.constant dense<0.000000e+00> : vector<16x16xf32>
    %184 = tpu.matmul %183, %181, %cst_71 {dimension_numbers = #tpu.dot_dimension_numbers<[1], [0], [0], [1], [0, 0, 1, 1], [], []>} : vector<16x8xf32>, vector<8x16xf32>, vector<16x16xf32> -> vector<16x16xf32>
    %185 = arith.addf %180, %184 : vector<16x16xf32>
    %186 = vector.broadcast %1 : vector<16x1xf32> to vector<16x16xf32>
    %187 = arith.addf %185, %186 : vector<16x16xf32>
    %cst_72 = arith.constant 2.000000e-01 : f32
    %188 = vector.broadcast %cst_72 : f32 to vector<16x16xf32>
    %189 = arith.mulf %188, %187 : vector<16x16xf32>
    %190 = arith.maximumf %187, %189 : vector<16x16xf32>
    %c7_73 = arith.constant 7 : index
    %c0_74 = arith.constant 0 : index
    %c0_75 = arith.constant 0 : index
    %191 = vector.load %arg4[%c7_73, %c0_74, %c0_75] : memref<8x16x16xf32, #tpu.memory_space<vmem>>, vector<1x16x16xf32>
    %192 = vector.shape_cast %191 : vector<1x16x16xf32> to vector<16x16xf32>
    %193 = vector.shape_cast %190 : vector<16x16xf32> to vector<1x16x16xf32>
    tpu.vector_store %arg4[%c7_73, %c0_74, %c0_75], %193 {strides = array<i32>} : memref<8x16x16xf32, #tpu.memory_space<vmem>>, vector<1x16x16xf32>,
    return
  }
  func.func @transform_0(%arg0: i32) -> (i32, i32, i32) {
    %c0_i32 = arith.constant 0 : i32
    %c0_i32_0 = arith.constant 0 : i32
    %c0_i32_1 = arith.constant 0 : i32
    return %arg0, %c0_i32, %c0_i32_0 : i32, i32, i32
  }
  func.func @transform_1(%arg0: i32) -> (i32, i32, i32) {
    %c0_i32 = arith.constant 0 : i32
    %c0_i32_0 = arith.constant 0 : i32
    %c0_i32_1 = arith.constant 0 : i32
    %c0_i32_2 = arith.constant 0 : i32
    return %c0_i32, %c0_i32_0, %c0_i32_1 : i32, i32, i32
  }
  func.func @transform_2(%arg0: i32) -> (i32, i32) {
    %c0_i32 = arith.constant 0 : i32
    %c0_i32_0 = arith.constant 0 : i32
    %c0_i32_1 = arith.constant 0 : i32
    return %c0_i32, %c0_i32_0 : i32, i32
  }
  func.func @transform_3(%arg0: i32) -> (i32, i32, i32) {
    %c0_i32 = arith.constant 0 : i32
    %c0_i32_0 = arith.constant 0 : i32
    %c0_i32_1 = arith.constant 0 : i32
    return %arg0, %c0_i32, %c0_i32_0 : i32, i32, i32
  }
}

</mosaic_0001>

<llo_original>
// kernel: tpu_custom_call.1
$region0: #{tpu_custom_call.1}
  #allocation0 [shape = 'u32[]', space=smem, size = 0x4, offset = 0x4, fixed_abs, tag = 'smem constant byte address 0x4 - core index']
  #allocation1 [shape = 'u32[144,128]{1,0:T(1,128)}', space=vmem, size = 0x12000, scoped, tag = 'internal scratch']
  %s0 = inlined_call_operand.vmem [shape: f32[8,8,20], index: 0, kind: input, shape index: {}]
  %s1 = inlined_call_operand.vmem [shape: f32[3,16,8], index: 1, kind: input, shape index: {}]
  %s2 = inlined_call_operand.vmem [shape: f32[16,1], index: 2, kind: input, shape index: {}]
  %s3 = inlined_call_operand.hbm [shape: f32[8,16,16], index: 3, kind: output, shape index: {}]
  %s4 = sld [smem:[#allocation0]]
  $region22: #{tpu_custom_call.1} parent=0
    _
  %s6 = ssub.s32 1, %s4
  %s7 = scalar_select 0, %s6, %s4
  $region1: #{tpu_custom_call.1} parent=0
    #allocation2 [shape = 'u8[65536]{0}', space=vmem, size = 0x10000, scoped, tag = 'output window, operand 0, single buffered']
    #allocation3 [shape = 's32[1]{0}', space=sflag, size = 0x4, scoped, tag = 'scoped memory for tpu_custom_call.1']
    %8 = vsyncpa [#allocation3], 0
    // Predicated region
    $region2: #{tpu_custom_call.1} parent=1 // pred_check
      _
    $region3: #{tpu_custom_call.1} parent=1 // pred_check_branch
      %10 = sbr.rel (0) target = $region5
    $region4: #{tpu_custom_call.1} parent=1 // pred_region
      _
    $region5: #{tpu_custom_call.1} parent=1 // pred_fallthru
      _
    // Predicated region
    $region6: #{tpu_custom_call.1} parent=1 // pred_check
      _
    $region7: #{tpu_custom_call.1} parent=1 // pred_check_branch
      %12 = sbr.rel (0) target = $region9
    $region8: #{tpu_custom_call.1} parent=1 // pred_region
      _
    $region9: #{tpu_custom_call.1} parent=1 // pred_fallthru
      _
    // Predicated region
    $region10: #{tpu_custom_call.1} parent=1 // pred_check
      _
    $region11: #{tpu_custom_call.1} parent=1 // pred_check_branch
      %14 = sbr.rel (0) target = $region13
    $region12: #{tpu_custom_call.1} parent=1 // pred_region
      _
    $region13: #{tpu_custom_call.1} parent=1 // pred_fallthru
      _
    %v15 = vld [vmem:[%s1] sm:$0xff]
    %v16 = vld [vmem:[%s1 + $0x8] sm:$0xff]
    %v17 = vld [vmem:[%s1 + $0x10] sm:$0xff]
    %v18 = vld [vmem:[%s1 + $0x18] sm:$0xff]
    %v19 = vld [vmem:[%s1 + $0x20] sm:$0xff]
    %v20 = vld [vmem:[%s1 + $0x28] sm:$0xff]
    %v21 = vld [vmem:[%s2] sm:$0xff]
    %v22 = vld [vmem:[%s2 + $0x8] sm:$0xff]
    %v23 = vld [vmem:[%s0] sm:$0xff]
    %25 = vrot.lane.b32.xlu0 %v23, 126
    %v26 = vpop.permute.xlu0 %25
    %vm28 = vcmask 64512
    %v30 = vsel %vm28, %v17, 0
    %v33 = vsel %vm28, %v18, 0
    %35 = vmatprep.subr.mxu0 0.0
    %36 = vmatpush1.msra.mxu0 %v26
    %37 = vmatprep.subr.mxu0 0.0
    %38 = vmatpush1.msra.mxu0 0.0
    %39 = vmatprep.subr.mxu0 0.0
    %40 = vmatpush1.msra.mxu0 0.0
    %41 = vmatprep.subr.mxu0 0.0
    %42 = vmatpush1.msra.mxu0 0.0
    %43 = vmatprep.subr.mxu0 0.0
    %44 = vmatpush1.msra.mxu0 0.0
    %45 = vmatprep.subr.mxu0 0.0
    %46 = vmatpush1.msra.mxu0 0.0
    %47 = vmatprep.subr.mxu0 0.0
    %48 = vmatpush1.msra.mxu0 0.0
    %49 = vmatprep.subr.mxu0 0.0
    %50 = vmatpush1.msra.mxu0 0.0
    %51 = vmatprep.subr.mxu0 0.0
    %52 = vmatpush1.msra.mxu0 0.0
    %53 = vmatprep.subr.mxu0 0.0
    %54 = vmatpush1.msra.mxu0 0.0
    %55 = vmatprep.subr.mxu0 0.0
    %56 = vmatpush1.msra.mxu0 0.0
    %57 = vmatprep.subr.mxu0 0.0
    %58 = vmatpush1.msra.mxu0 0.0
    %59 = vmatprep.subr.mxu0 0.0
    %60 = vmatpush1.msra.mxu0 0.0
    %61 = vmatprep.subr.mxu0 0.0
    %62 = vmatpush1.msra.mxu0 0.0
    %63 = vmatprep.subr.mxu0 0.0
    %64 = vmatpush1.msra.mxu0 0.0
    %65 = vmatprep.subr.mxu0 0.0
    %66 = vmatpush1.msra.mxu0 0.0
    %67 = vmatprep.subr.mxu0 0.0
    %68 = vmatpush1.msra.mxu0 0.0
    %69 = vmatprep.subr.mxu0 0.0
    %70 = vmatpush1.msra.mxu0 0.0
    %71 = vmatprep.subr.mxu0 0.0
    %72 = vmatpush1.msra.mxu0 0.0
    %73 = vmatprep.subr.mxu0 0.0
    %74 = vmatpush1.msra.mxu0 0.0
    %75 = vmatprep.subr.mxu0 0.0
    %76 = vmatpush1.msra.mxu0 0.0
    %77 = vmatprep.subr.mxu0 0.0
    %78 = vmatpush1.msra.mxu0 0.0
    %79 = vmatprep.subr.mxu0 0.0
    %80 = vmatpush1.msra.mxu0 0.0
    %81 = vmatprep.subr.mxu0 0.0
    %82 = vmatpush1.msra.mxu0 0.0
    %83 = vmatprep.subr.mxu0 0.0
    %84 = vmatpush1.msra.mxu0 0.0
    %85 = vmatprep.subr.mxu0 0.0
    %86 = vmatpush1.msra.mxu0 0.0
    %87 = vmatprep.subr.mxu0 0.0
    %88 = vmatpush1.msra.mxu0 0.0
    %89 = vmatprep.subr.mxu0 0.0
    %90 = vmatpush1.msra.mxu0 0.0
    %91 = vmatprep.subr.mxu0 0.0
    %92 = vmatpush1.msra.mxu0 0.0
    %93 = vmatprep.subr.mxu0 0.0
    %94 = vmatpush1.msra.mxu0 0.0
    %95 = vmatprep.subr.mxu0 0.0
    %96 = vmatpush1.msra.mxu0 0.0
    %97 = vmatprep.subr.mxu0 0.0
    %98 = vmatpush1.msra.mxu0 0.0
    %99 = vmatprep.mubr.f32.mxu0 0.0
    %100 = vmatmul.mubr.f32.gmra.mrb[0].mxu0 %v30
    %v101 = vpop.f32.mrb[0].mxu0
    %v102 = vadd.f32 0.0, %v101
    %v103 = vpop.f32.mrb[0].mxu0
    %104 = vmatprep.mubr.f32.mxu0 0.0
    %105 = vmatmul.mubr.f32.gmra.mrb[0].mxu0 %v33
    %v106 = vpop.f32.mrb[0].mxu0
    %v107 = vadd.f32 0.0, %v106
    %v108 = vpop.f32.mrb[0].mxu0
    %109 = vdwg.mxu0
    %v111 = vsel %vm28, %v15, 0
    %v114 = vsel %vm28, %v16, 0
    %116 = vmatprep.subr.mxu0 0.0
    %117 = vmatpush1.msra.mxu0 %v23
    %118 = vmatprep.subr.mxu0 0.0
    %119 = vmatpush1.msra.mxu0 0.0
    %120 = vmatprep.subr.mxu0 0.0
    %121 = vmatpush1.msra.mxu0 0.0
    %122 = vmatprep.subr.mxu0 0.0
    %123 = vmatpush1.msra.mxu0 0.0
    %124 = vmatprep.subr.mxu0 0.0
    %125 = vmatpush1.msra.mxu0 0.0
    %126 = vmatprep.subr.mxu0 0.0
    %127 = vmatpush1.msra.mxu0 0.0
    %128 = vmatprep.subr.mxu0 0.0
    %129 = vmatpush1.msra.mxu0 0.0
    %130 = vmatprep.subr.mxu0 0.0
    %131 = vmatpush1.msra.mxu0 0.0
    %132 = vmatprep.subr.mxu0 0.0
    %133 = vmatpush1.msra.mxu0 0.0
    %134 = vmatprep.subr.mxu0 0.0
    %135 = vmatpush1.msra.mxu0 0.0
    %136 = vmatprep.subr.mxu0 0.0
    %137 = vmatpush1.msra.mxu0 0.0
    %138 = vmatprep.subr.mxu0 0.0
    %139 = vmatpush1.msra.mxu0 0.0
    %140 = vmatprep.subr.mxu0 0.0
    %141 = vmatpush1.msra.mxu0 0.0
    %142 = vmatprep.subr.mxu0 0.0
    %143 = vmatpush1.msra.mxu0 0.0
    %144 = vmatprep.subr.mxu0 0.0
    %145 = vmatpush1.msra.mxu0 0.0
    %146 = vmatprep.subr.mxu0 0.0
    %147 = vmatpush1.msra.mxu0 0.0
    %148 = vmatprep.subr.mxu0 0.0
    %149 = vmatpush1.msra.mxu0 0.0
    %150 = vmatprep.subr.mxu0 0.0
    %151 = vmatpush1.msra.mxu0 0.0
    %152 = vmatprep.subr.mxu0 0.0
    %153 = vmatpush1.msra.mxu0 0.0
    %154 = vmatprep.subr.mxu0 0.0
    %155 = vmatpush1.msra.mxu0 0.0
    %156 = vmatprep.subr.mxu0 0.0
    %157 = vmatpush1.msra.mxu0 0.0
    %158 = vmatprep.subr.mxu0 0.0
    %159 = vmatpush1.msra.mxu0 0.0
    %160 = vmatprep.subr.mxu0 0.0
    %161 = vmatpush1.msra.mxu0 0.0
    %162 = vmatprep.subr.mxu0 0.0
    %163 = vmatpush1.msra.mxu0 0.0
    %164 = vmatprep.subr.mxu0 0.0
    %165 = vmatpush1.msra.mxu0 0.0
    %166 = vmatprep.subr.mxu0 0.0
    %167 = vmatpush1.msra.mxu0 0.0
    %168 = vmatprep.subr.mxu0 0.0
    %169 = vmatpush1.msra.mxu0 0.0
    %170 = vmatprep.subr.mxu0 0.0
    %171 = vmatpush1.msra.mxu0 0.0
    %172 = vmatprep.subr.mxu0 0.0
    %173 = vmatpush1.msra.mxu0 0.0
    %174 = vmatprep.subr.mxu0 0.0
    %175 = vmatpush1.msra.mxu0 0.0
    %176 = vmatprep.subr.mxu0 0.0
    %177 = vmatpush1.msra.mxu0 0.0
    %178 = vmatprep.subr.mxu0 0.0
    %179 = vmatpush1.msra.mxu0 0.0
    %180 = vmatprep.mubr.f32.mxu0 0.0
    %181 = vmatmul.mubr.f32.gmra.mrb[0].mxu0 %v111
    %v182 = vpop.f32.mrb[0].mxu0
    %v183 = vadd.f32 %v102, %v182
    %v184 = vpop.f32.mrb[0].mxu0
    %185 = vmatprep.mubr.f32.mxu0 0.0
    %186 = vmatmul.mubr.f32.gmra.mrb[0].mxu0 %v114
    %v187 = vpop.f32.mrb[0].mxu0
    %v188 = vadd.f32 %v107, %v187
    %v189 = vpop.f32.mrb[0].mxu0
    %190 = vdwg.mxu0
    %191 = vrot.lane.b32.xlu0 %v23, 124
    %v192 = vpop.permute.xlu0 %191
    %v195 = vsel %vm28, %v19, 0
    %v198 = vsel %vm28, %v20, 0
    %200 = vmatprep.subr.mxu0 0.0
    %201 = vmatpush1.msra.mxu0 %v192
    %202 = vmatprep.subr.mxu0 0.0
    %203 = vmatpush1.msra.mxu0 0.0
    %204 = vmatprep.subr.mxu0 0.0
    %205 = vmatpush1.msra.mxu0 0.0
    %206 = vmatprep.subr.mxu0 0.0
    %207 = vmatpush1.msra.mxu0 0.0
    %208 = vmatprep.subr.mxu0 0.0
    %209 = vmatpush1.msra.mxu0 0.0
    %210 = vmatprep.subr.mxu0 0.0
    %211 = vmatpush1.msra.mxu0 0.0
    %212 = vmatprep.subr.mxu0 0.0
    %213 = vmatpush1.msra.mxu0 0.0
    %214 = vmatprep.subr.mxu0 0.0
    %215 = vmatpush1.msra.mxu0 0.0
    %216 = vmatprep.subr.mxu0 0.0
    %217 = vmatpush1.msra.mxu0 0.0
    %218 = vmatprep.subr.mxu0 0.0
    %219 = vmatpush1.msra.mxu0 0.0
    %220 = vmatprep.subr.mxu0 0.0
    %221 = vmatpush1.msra.mxu0 0.0
    %222 = vmatprep.subr.mxu0 0.0
    %223 = vmatpush1.msra.mxu0 0.0
    %224 = vmatprep.subr.mxu0 0.0
    %225 = vmatpush1.msra.mxu0 0.0
    %226 = vmatprep.subr.mxu0 0.0
    %227 = vmatpush1.msra.mxu0 0.0
    %228 = vmatprep.subr.mxu0 0.0
    %229 = vmatpush1.msra.mxu0 0.0
    %230 = vmatprep.subr.mxu0 0.0
    %231 = vmatpush1.msra.mxu0 0.0
    %232 = vmatprep.subr.mxu0 0.0
    %233 = vmatpush1.msra.mxu0 0.0
    %234 = vmatprep.subr.mxu0 0.0
    %235 = vmatpush1.msra.mxu0 0.0
    %236 = vmatprep.subr.mxu0 0.0
    %237 = vmatpush1.msra.mxu0 0.0
    %238 = vmatprep.subr.mxu0 0.0
    %239 = vmatpush1.msra.mxu0 0.0
    %240 = vmatprep.subr.mxu0 0.0
    %241 = vmatpush1.msra.mxu0 0.0
    %242 = vmatprep.subr.mxu0 0.0
    %243 = vmatpush1.msra.mxu0 0.0
    %244 = vmatprep.subr.mxu0 0.0
    %245 = vmatpush1.msra.mxu0 0.0
    %246 = vmatprep.subr.mxu0 0.0
    %247 = vmatpush1.msra.mxu0 0.0
    %248 = vmatprep.subr.mxu0 0.0
    %249 = vmatpush1.msra.mxu0 0.0
    %250 = vmatprep.subr.mxu0 0.0
    %251 = vmatpush1.msra.mxu0 0.0
    %252 = vmatprep.subr.mxu0 0.0
    %253 = vmatpush1.msra.mxu0 0.0
    %254 = vmatprep.subr.mxu0 0.0
    %255 = vmatpush1.msra.mxu0 0.0
    %256 = vmatprep.subr.mxu0 0.0
    %257 = vmatpush1.msra.mxu0 0.0
    %258 = vmatprep.subr.mxu0 0.0
    %259 = vmatpush1.msra.mxu0 0.0
    %260 = vmatprep.subr.mxu0 0.0
    %261 = vmatpush1.msra.mxu0 0.0
    %262 = vmatprep.subr.mxu0 0.0
    %263 = vmatpush1.msra.mxu0 0.0
    %264 = vmatprep.mubr.f32.mxu0 0.0
    %265 = vmatmul.mubr.f32.gmra.mrb[0].mxu0 %v195
    %v266 = vpop.f32.mrb[0].mxu0
    %v267 = vadd.f32 0.0, %v266
    %v268 = vpop.f32.mrb[0].mxu0
    %269 = vmatprep.mubr.f32.mxu0 0.0
    %270 = vmatmul.mubr.f32.gmra.mrb[0].mxu0 %v198
    %v271 = vpop.f32.mrb[0].mxu0
    %v272 = vadd.f32 0.0, %v271
    %v273 = vpop.f32.mrb[0].mxu0
    %274 = vdwg.mxu0
    %v275 = vadd.f32 %v183, %v267
    %v276 = vadd.f32 %v188, %v272
    %278 = vset.pattern.permute.xlu0 0
    %279 = vperm.xlu0 %278, %v21
    %v280 = vpop.permute.xlu0 %279
    %283 = vset.pattern.permute.xlu0 0
    %284 = vperm.xlu0 %283, %v22
    %v285 = vpop.permute.xlu0 %284
    %v287 = vadd.f32 %v275, %v280
    %v288 = vadd.f32 %v276, %v285
    %v289 = vmul.f32 %v287, 0.2
    %v290 = vmul.f32 %v288, 0.2
    %v291 = vmax.f32 %v287, %v289
    %v292 = vmax.f32 %v288, %v290
    %vm293 = vcmask 130048
    %294 = vst.msk [vmem:[#allocation2] sm:$0xff] %vm293, %v291
    %295 = vst.msk [vmem:[#allocation2 + $0x8] sm:$0xff] %vm293, %v292
    %s296 = scalar_lea.vmem %s0, 8
    %v297 = vld [vmem:[%s296] sm:$0xff]
    %299 = vrot.lane.b32.xlu0 %v297, 126
    %v300 = vpop.permute.xlu0 %299
    %302 = vmatprep.subr.mxu0 0.0
    %303 = vmatpush1.msra.mxu0 %v300
    %304 = vmatprep.subr.mxu0 0.0
    %305 = vmatpush1.msra.mxu0 0.0
    %306 = vmatprep.subr.mxu0 0.0
    %307 = vmatpush1.msra.mxu0 0.0
    %308 = vmatprep.subr.mxu0 0.0
    %309 = vmatpush1.msra.mxu0 0.0
    %310 = vmatprep.subr.mxu0 0.0
    %311 = vmatpush1.msra.mxu0 0.0
    %312 = vmatprep.subr.mxu0 0.0
    %313 = vmatpush1.msra.mxu0 0.0
    %314 = vmatprep.subr.mxu0 0.0
    %315 = vmatpush1.msra.mxu0 0.0
    %316 = vmatprep.subr.mxu0 0.0
    %317 = vmatpush1.msra.mxu0 0.0
    %318 = vmatprep.subr.mxu0 0.0
    %319 = vmatpush1.msra.mxu0 0.0
    %320 = vmatprep.subr.mxu0 0.0
    %321 = vmatpush1.msra.mxu0 0.0
    %322 = vmatprep.subr.mxu0 0.0
    %323 = vmatpush1.msra.mxu0 0.0
    %324 = vmatprep.subr.mxu0 0.0
    %325 = vmatpush1.msra.mxu0 0.0
    %326 = vmatprep.subr.mxu0 0.0
    %327 = vmatpush1.msra.mxu0 0.0
    %328 = vmatprep.subr.mxu0 0.0
    %329 = vmatpush1.msra.mxu0 0.0
    %330 = vmatprep.subr.mxu0 0.0
    %331 = vmatpush1.msra.mxu0 0.0
    %332 = vmatprep.subr.mxu0 0.0
    %333 = vmatpush1.msra.mxu0 0.0
    %334 = vmatprep.subr.mxu0 0.0
    %335 = vmatpush1.msra.mxu0 0.0
    %336 = vmatprep.subr.mxu0 0.0
    %337 = vmatpush1.msra.mxu0 0.0
    %338 = vmatprep.subr.mxu0 0.0
    %339 = vmatpush1.msra.mxu0 0.0
    %340 = vmatprep.subr.mxu0 0.0
    %341 = vmatpush1.msra.mxu0 0.0
    %342 = vmatprep.subr.mxu0 0.0
    %343 = vmatpush1.msra.mxu0 0.0
    %344 = vmatprep.subr.mxu0 0.0
    %345 = vmatpush1.msra.mxu0 0.0
    %346 = vmatprep.subr.mxu0 0.0
    %347 = vmatpush1.msra.mxu0 0.0
    %348 = vmatprep.subr.mxu0 0.0
    %349 = vmatpush1.msra.mxu0 0.0
    %350 = vmatprep.subr.mxu0 0.0
    %351 = vmatpush1.msra.mxu0 0.0
    %352 = vmatprep.subr.mxu0 0.0
    %353 = vmatpush1.msra.mxu0 0.0
    %354 = vmatprep.subr.mxu0 0.0
    %355 = vmatpush1.msra.mxu0 0.0
    %356 = vmatprep.subr.mxu0 0.0
    %357 = vmatpush1.msra.mxu0 0.0
    %358 = vmatprep.subr.mxu0 0.0
    %359 = vmatpush1.msra.mxu0 0.0
    %360 = vmatprep.subr.mxu0 0.0
    %361 = vmatpush1.msra.mxu0 0.0
    %362 = vmatprep.subr.mxu0 0.0
    %363 = vmatpush1.msra.mxu0 0.0
    %364 = vmatprep.subr.mxu0 0.0
    %365 = vmatpush1.msra.mxu0 0.0
    %366 = vmatprep.mubr.f32.mxu0 0.0
    %367 = vmatmul.mubr.f32.gmra.mrb[0].mxu0 %v30
    %v368 = vpop.f32.mrb[0].mxu0
    %v369 = vadd.f32 0.0, %v368
    %v370 = vpop.f32.mrb[0].mxu0
    %371 = vmatprep.mubr.f32.mxu0 0.0
    %372 = vmatmul.mubr.f32.gmra.mrb[0].mxu0 %v33
    %v373 = vpop.f32.mrb[0].mxu0
    %v374 = vadd.f32 0.0, %v373
    %v375 = vpop.f32.mrb[0].mxu0
    %376 = vdwg.mxu0
    %377 = vmatprep.subr.mxu0 0.0
    %378 = vmatpush1.msra.mxu0 %v297
    %379 = vmatprep.subr.mxu0 0.0
    %380 = vmatpush1.msra.mxu0 0.0
    %381 = vmatprep.subr.mxu0 0.0
    %382 = vmatpush1.msra.mxu0 0.0
    %383 = vmatprep.subr.mxu0 0.0
    %384 = vmatpush1.msra.mxu0 0.0
    %385 = vmatprep.subr.mxu0 0.0
    %386 = vmatpush1.msra.mxu0 0.0
    %387 = vmatprep.subr.mxu0 0.0
    %388 = vmatpush1.msra.mxu0 0.0
    %389 = vmatprep.subr.mxu0 0.0
    %390 = vmatpush1.msra.mxu0 0.0
    %391 = vmatprep.subr.mxu0 0.0
    %392 = vmatpush1.msra.mxu0 0.0
    %393 = vmatprep.subr.mxu0 0.0
    %394 = vmatpush1.msra.mxu0 0.0
    %395 = vmatprep.subr.mxu0 0.0
    %396 = vmatpush1.msra.mxu0 0.0
    %397 = vmatprep.subr.mxu0 0.0
    %398 = vmatpush1.msra.mxu0 0.0
    %399 = vmatprep.subr.mxu0 0.0
    %400 = vmatpush1.msra.mxu0 0.0
    %401 = vmatprep.subr.mxu0 0.0
    %402 = vmatpush1.msra.mxu0 0.0
    %403 = vmatprep.subr.mxu0 0.0
    %404 = vmatpush1.msra.mxu0 0.0
    %405 = vmatprep.subr.mxu0 0.0
    %406 = vmatpush1.msra.mxu0 0.0
    %407 = vmatprep.subr.mxu0 0.0
    %408 = vmatpush1.msra.mxu0 0.0
    %409 = vmatprep.subr.mxu0 0.0
    %410 = vmatpush1.msra.mxu0 0.0
    %411 = vmatprep.subr.mxu0 0.0
    %412 = vmatpush1.msra.mxu0 0.0
    %413 = vmatprep.subr.mxu0 0.0
    %414 = vmatpush1.msra.mxu0 0.0
    %415 = vmatprep.subr.mxu0 0.0
    %416 = vmatpush1.msra.mxu0 0.0
    %417 = vmatprep.subr.mxu0 0.0
    %418 = vmatpush1.msra.mxu0 0.0
    %419 = vmatprep.subr.mxu0 0.0
    %420 = vmatpush1.msra.mxu0 0.0
    %421 = vmatprep.subr.mxu0 0.0
    %422 = vmatpush1.msra.mxu0 0.0
    %423 = vmatprep.subr.mxu0 0.0
    %424 = vmatpush1.msra.mxu0 0.0
    %425 = vmatprep.subr.mxu0 0.0
    %426 = vmatpush1.msra.mxu0 0.0
    %427 = vmatprep.subr.mxu0 0.0
    %428 = vmatpush1.msra.mxu0 0.0
    %429 = vmatprep.subr.mxu0 0.0
    %430 = vmatpush1.msra.mxu0 0.0
    %431 = vmatprep.subr.mxu0 0.0
    %432 = vmatpush1.msra.mxu0 0.0
    %433 = vmatprep.subr.mxu0 0.0
    %434 = vmatpush1.msra.mxu0 0.0
    %435 = vmatprep.subr.mxu0 0.0
    %436 = vmatpush1.msra.mxu0 0.0
    %437 = vmatprep.subr.mxu0 0.0
    %438 = vmatpush1.msra.mxu0 0.0
    %439 = vmatprep.subr.mxu0 0.0
    %440 = vmatpush1.msra.mxu0 0.0
    %441 = vmatprep.mubr.f32.mxu0 0.0
    %442 = vmatmul.mubr.f32.gmra.mrb[0].mxu0 %v111
    %v443 = vpop.f32.mrb[0].mxu0
    %v444 = vadd.f32 %v369, %v443
    %v445 = vpop.f32.mrb[0].mxu0
    %446 = vmatprep.mubr.f32.mxu0 0.0
    %447 = vmatmul.mubr.f32.gmra.mrb[0].mxu0 %v114
    %v448 = vpop.f32.mrb[0].mxu0
    %v449 = vadd.f32 %v374, %v448
    %v450 = vpop.f32.mrb[0].mxu0
    %451 = vdwg.mxu0
    %452 = vrot.lane.b32.xlu0 %v297, 124
    %v453 = vpop.permute.xlu0 %452
    %455 = vmatprep.subr.mxu0 0.0
    %456 = vmatpush1.msra.mxu0 %v453
    %457 = vmatprep.subr.mxu0 0.0
    %458 = vmatpush1.msra.mxu0 0.0
    %459 = vmatprep.subr.mxu0 0.0
    %460 = vmatpush1.msra.mxu0 0.0
    %461 = vmatprep.subr.mxu0 0.0
    %462 = vmatpush1.msra.mxu0 0.0
    %463 = vmatprep.subr.mxu0 0.0
    %464 = vmatpush1.msra.mxu0 0.0
    %465 = vmatprep.subr.mxu0 0.0
    %466 = vmatpush1.msra.mxu0 0.0
    %467 = vmatprep.subr.mxu0 0.0
    %468 = vmatpush1.msra.mxu0 0.0
    %469 = vmatprep.subr.mxu0 0.0
    %470 = vmatpush1.msra.mxu0 0.0
    %471 = vmatprep.subr.mxu0 0.0
    %472 = vmatpush1.msra.mxu0 0.0
    %473 = vmatprep.subr.mxu0 0.0
    %474 = vmatpush1.msra.mxu0 0.0
    %475 = vmatprep.subr.mxu0 0.0
    %476 = vmatpush1.msra.mxu0 0.0
    %477 = vmatprep.subr.mxu0 0.0
    %478 = vmatpush1.msra.mxu0 0.0
    %479 = vmatprep.subr.mxu0 0.0
    %480 = vmatpush1.msra.mxu0 0.0
    %481 = vmatprep.subr.mxu0 0.0
    %482 = vmatpush1.msra.mxu0 0.0
    %483 = vmatprep.subr.mxu0 0.0
    %484 = vmatpush1.msra.mxu0 0.0
    %485 = vmatprep.subr.mxu0 0.0
    %486 = vmatpush1.msra.mxu0 0.0
    %487 = vmatprep.subr.mxu0 0.0
    %488 = vmatpush1.msra.mxu0 0.0
    %489 = vmatprep.subr.mxu0 0.0
    %490 = vmatpush1.msra.mxu0 0.0
    %491 = vmatprep.subr.mxu0 0.0
    %492 = vmatpush1.msra.mxu0 0.0
    %493 = vmatprep.subr.mxu0 0.0
    %494 = vmatpush1.msra.mxu0 0.0
    %495 = vmatprep.subr.mxu0 0.0
    %496 = vmatpush1.msra.mxu0 0.0
    %497 = vmatprep.subr.mxu0 0.0
    %498 = vmatpush1.msra.mxu0 0.0
    %499 = vmatprep.subr.mxu0 0.0
    %500 = vmatpush1.msra.mxu0 0.0
    %501 = vmatprep.subr.mxu0 0.0
    %502 = vmatpush1.msra.mxu0 0.0
    %503 = vmatprep.subr.mxu0 0.0
    %504 = vmatpush1.msra.mxu0 0.0
    %505 = vmatprep.subr.mxu0 0.0
    %506 = vmatpush1.msra.mxu0 0.0
    %507 = vmatprep.subr.mxu0 0.0
    %508 = vmatpush1.msra.mxu0 0.0
    %509 = vmatprep.subr.mxu0 0.0
    %510 = vmatpush1.msra.mxu0 0.0
    %511 = vmatprep.subr.mxu0 0.0
    %512 = vmatpush1.msra.mxu0 0.0
    %513 = vmatprep.subr.mxu0 0.0
    %514 = vmatpush1.msra.mxu0 0.0
    %515 = vmatprep.subr.mxu0 0.0
    %516 = vmatpush1.msra.mxu0 0.0
    %517 = vmatprep.subr.mxu0 0.0
    %518 = vmatpush1.msra.mxu0 0.0
    %519 = vmatprep.mubr.f32.mxu0 0.0
    %520 = vmatmul.mubr.f32.gmra.mrb[0].mxu0 %v195
    %v521 = vpop.f32.mrb[0].mxu0
    %v522 = vadd.f32 0.0, %v521
    %v523 = vpop.f32.mrb[0].mxu0
    %524 = vmatprep.mubr.f32.mxu0 0.0
    %525 = vmatmul.mubr.f32.gmra.mrb[0].mxu0 %v198
    %v526 = vpop.f32.mrb[0].mxu0
    %v527 = vadd.f32 0.0, %v526
    %v528 = vpop.f32.mrb[0].mxu0
    %529 = vdwg.mxu0
    %v530 = vadd.f32 %v444, %v522
    %v531 = vadd.f32 %v449, %v527
    %v532 = vadd.f32 %v530, %v280
    %v533 = vadd.f32 %v531, %v285
    %v534 = vmul.f32 %v532, 0.2
    %v535 = vmul.f32 %v533, 0.2
    %v536 = vmax.f32 %v532, %v534
    %v537 = vmax.f32 %v533, %v535
    %s538 = scalar_lea.vmem [#allocation2], 16
    %539 = vst.msk [vmem:[%s538] sm:$0xff] %vm293, %v536
    %540 = vst.msk [vmem:[%s538 + $0x8] sm:$0xff] %vm293, %v537
    %s541 = scalar_lea.vmem %s0, 16
    %v542 = vld [vmem:[%s541] sm:$0xff]
    %544 = vrot.lane.b32.xlu0 %v542, 126
    %v545 = vpop.permute.xlu0 %544
    %547 = vmatprep.subr.mxu0 0.0
    %548 = vmatpush1.msra.mxu0 %v545
    %549 = vmatprep.subr.mxu0 0.0
    %550 = vmatpush1.msra.mxu0 0.0
    %551 = vmatprep.subr.mxu0 0.0
    %552 = vmatpush1.msra.mxu0 0.0
    %553 = vmatprep.subr.mxu0 0.0
    %554 = vmatpush1.msra.mxu0 0.0
    %555 = vmatprep.subr.mxu0 0.0
    %556 = vmatpush1.msra.mxu0 0.0
    %557 = vmatprep.subr.mxu0 0.0
    %558 = vmatpush1.msra.mxu0 0.0
    %559 = vmatprep.subr.mxu0 0.0
    %560 = vmatpush1.msra.mxu0 0.0
    %561 = vmatprep.subr.mxu0 0.0
    %562 = vmatpush1.msra.mxu0 0.0
    %563 = vmatprep.subr.mxu0 0.0
    %564 = vmatpush1.msra.mxu0 0.0
    %565 = vmatprep.subr.mxu0 0.0
    %566 = vmatpush1.msra.mxu0 0.0
    %567 = vmatprep.subr.mxu0 0.0
    %568 = vmatpush1.msra.mxu0 0.0
    %569 = vmatprep.subr.mxu0 0.0
    %570 = vmatpush1.msra.mxu0 0.0
    %571 = vmatprep.subr.mxu0 0.0
    %572 = vmatpush1.msra.mxu0 0.0
    %573 = vmatprep.subr.mxu0 0.0
    %574 = vmatpush1.msra.mxu0 0.0
    %575 = vmatprep.subr.mxu0 0.0
    %576 = vmatpush1.msra.mxu0 0.0
    %577 = vmatprep.subr.mxu0 0.0
    %578 = vmatpush1.msra.mxu0 0.0
    %579 = vmatprep.subr.mxu0 0.0
    %580 = vmatpush1.msra.mxu0 0.0
    %581 = vmatprep.subr.mxu0 0.0
    %582 = vmatpush1.msra.mxu0 0.0
    %583 = vmatprep.subr.mxu0 0.0
    %584 = vmatpush1.msra.mxu0 0.0
    %585 = vmatprep.subr.mxu0 0.0
    %586 = vmatpush1.msra.mxu0 0.0
    %587 = vmatprep.subr.mxu0 0.0
    %588 = vmatpush1.msra.mxu0 0.0
    %589 = vmatprep.subr.mxu0 0.0
    %590 = vmatpush1.msra.mxu0 0.0
    %591 = vmatprep.subr.mxu0 0.0
    %592 = vmatpush1.msra.mxu0 0.0
    %593 = vmatprep.subr.mxu0 0.0
    %594 = vmatpush1.msra.mxu0 0.0
    %595 = vmatprep.subr.mxu0 0.0
    %596 = vmatpush1.msra.mxu0 0.0
    %597 = vmatprep.subr.mxu0 0.0
    %598 = vmatpush1.msra.mxu0 0.0
    %599 = vmatprep.subr.mxu0 0.0
    %600 = vmatpush1.msra.mxu0 0.0
    %601 = vmatprep.subr.mxu0 0.0
    %602 = vmatpush1.msra.mxu0 0.0
    %603 = vmatprep.subr.mxu0 0.0
    %604 = vmatpush1.msra.mxu0 0.0
    %605 = vmatprep.subr.mxu0 0.0
    %606 = vmatpush1.msra.mxu0 0.0
    %607 = vmatprep.subr.mxu0 0.0
    %608 = vmatpush1.msra.mxu0 0.0
    %609 = vmatprep.subr.mxu0 0.0
    %610 = vmatpush1.msra.mxu0 0.0
    %611 = vmatprep.mubr.f32.mxu0 0.0
    %612 = vmatmul.mubr.f32.gmra.mrb[0].mxu0 %v30
    %v613 = vpop.f32.mrb[0].mxu0
    %v614 = vadd.f32 0.0, %v613
    %v615 = vpop.f32.mrb[0].mxu0
    %616 = vmatprep.mubr.f32.mxu0 0.0
    %617 = vmatmul.mubr.f32.gmra.mrb[0].mxu0 %v33
    %v618 = vpop.f32.mrb[0].mxu0
    %v619 = vadd.f32 0.0, %v618
    %v620 = vpop.f32.mrb[0].mxu0
    %621 = vdwg.mxu0
    %622 = vmatprep.subr.mxu0 0.0
    %623 = vmatpush1.msra.mxu0 %v542
    %624 = vmatprep.subr.mxu0 0.0
    %625 = vmatpush1.msra.mxu0 0.0
    %626 = vmatprep.subr.mxu0 0.0
    %627 = vmatpush1.msra.mxu0 0.0
    %628 = vmatprep.subr.mxu0 0.0
    %629 = vmatpush1.msra.mxu0 0.0
    %630 = vmatprep.subr.mxu0 0.0
    %631 = vmatpush1.msra.mxu0 0.0
    %632 = vmatprep.subr.mxu0 0.0
    %633 = vmatpush1.msra.mxu0 0.0
    %634 = vmatprep.subr.mxu0 0.0
    %635 = vmatpush1.msra.mxu0 0.0
    %636 = vmatprep.subr.mxu0 0.0
    %637 = vmatpush1.msra.mxu0 0.0
    %638 = vmatprep.subr.mxu0 0.0
    %639 = vmatpush1.msra.mxu0 0.0
    %640 = vmatprep.subr.mxu0 0.0
    %641 = vmatpush1.msra.mxu0 0.0
    %642 = vmatprep.subr.mxu0 0.0
    %643 = vmatpush1.msra.mxu0 0.0
    %644 = vmatprep.subr.mxu0 0.0
    %645 = vmatpush1.msra.mxu0 0.0
    %646 = vmatprep.subr.mxu0 0.0
    %647 = vmatpush1.msra.mxu0 0.0
    %648 = vmatprep.subr.mxu0 0.0
    %649 = vmatpush1.msra.mxu0 0.0
    %650 = vmatprep.subr.mxu0 0.0
    %651 = vmatpush1.msra.mxu0 0.0
    %652 = vmatprep.subr.mxu0 0.0
    %653 = vmatpush1.msra.mxu0 0.0
    %654 = vmatprep.subr.mxu0 0.0
    %655 = vmatpush1.msra.mxu0 0.0
    %656 = vmatprep.subr.mxu0 0.0
    %657 = vmatpush1.msra.mxu0 0.0
    %658 = vmatprep.subr.mxu0 0.0
    %659 = vmatpush1.msra.mxu0 0.0
    %660 = vmatprep.subr.mxu0 0.0
    %661 = vmatpush1.msra.mxu0 0.0
    %662 = vmatprep.subr.mxu0 0.0
    %663 = vmatpush1.msra.mxu0 0.0
    %664 = vmatprep.subr.mxu0 0.0
    %665 = vmatpush1.msra.mxu0 0.0
    %666 = vmatprep.subr.mxu0 0.0
    %667 = vmatpush1.msra.mxu0 0.0
    %668 = vmatprep.subr.mxu0 0.0
    %669 = vmatpush1.msra.mxu0 0.0
    %670 = vmatprep.subr.mxu0 0.0
    %671 = vmatpush1.msra.mxu0 0.0
    %672 = vmatprep.subr.mxu0 0.0
    %673 = vmatpush1.msra.mxu0 0.0
    %674 = vmatprep.subr.mxu0 0.0
    %675 = vmatpush1.msra.mxu0 0.0
    %676 = vmatprep.subr.mxu0 0.0
    %677 = vmatpush1.msra.mxu0 0.0
    %678 = vmatprep.subr.mxu0 0.0
    %679 = vmatpush1.msra.mxu0 0.0
    %680 = vmatprep.subr.mxu0 0.0
    %681 = vmatpush1.msra.mxu0 0.0
    %682 = vmatprep.subr.mxu0 0.0
    %683 = vmatpush1.msra.mxu0 0.0
    %684 = vmatprep.subr.mxu0 0.0
    %685 = vmatpush1.msra.mxu0 0.0
    %686 = vmatprep.mubr.f32.mxu0 0.0
    %687 = vmatmul.mubr.f32.gmra.mrb[0].mxu0 %v111
    %v688 = vpop.f32.mrb[0].mxu0
    %v689 = vadd.f32 %v614, %v688
    %v690 = vpop.f32.mrb[0].mxu0
    %691 = vmatprep.mubr.f32.mxu0 0.0
    %692 = vmatmul.mubr.f32.gmra.mrb[0].mxu0 %v114
    %v693 = vpop.f32.mrb[0].mxu0
    %v694 = vadd.f32 %v619, %v693
    %v695 = vpop.f32.mrb[0].mxu0
    %696 = vdwg.mxu0
    %697 = vrot.lane.b32.xlu0 %v542, 124
    %v698 = vpop.permute.xlu0 %697
    %700 = vmatprep.subr.mxu0 0.0
    %701 = vmatpush1.msra.mxu0 %v698
    %702 = vmatprep.subr.mxu0 0.0
    %703 = vmatpush1.msra.mxu0 0.0
    %704 = vmatprep.subr.mxu0 0.0
    %705 = vmatpush1.msra.mxu0 0.0
    %706 = vmatprep.subr.mxu0 0.0
    %707 = vmatpush1.msra.mxu0 0.0
    %708 = vmatprep.subr.mxu0 0.0
    %709 = vmatpush1.msra.mxu0 0.0
    %710 = vmatprep.subr.mxu0 0.0
    %711 = vmatpush1.msra.mxu0 0.0
    %712 = vmatprep.subr.mxu0 0.0
    %713 = vmatpush1.msra.mxu0 0.0
    %714 = vmatprep.subr.mxu0 0.0
    %715 = vmatpush1.msra.mxu0 0.0
    %716 = vmatprep.subr.mxu0 0.0
    %717 = vmatpush1.msra.mxu0 0.0
    %718 = vmatprep.subr.mxu0 0.0
    %719 = vmatpush1.msra.mxu0 0.0
    %720 = vmatprep.subr.mxu0 0.0
    %721 = vmatpush1.msra.mxu0 0.0
    %722 = vmatprep.subr.mxu0 0.0
    %723 = vmatpush1.msra.mxu0 0.0
    %724 = vmatprep.subr.mxu0 0.0
    %725 = vmatpush1.msra.mxu0 0.0
    %726 = vmatprep.subr.mxu0 0.0
    %727 = vmatpush1.msra.mxu0 0.0
    %728 = vmatprep.subr.mxu0 0.0
    %729 = vmatpush1.msra.mxu0 0.0
    %730 = vmatprep.subr.mxu0 0.0
    %731 = vmatpush1.msra.mxu0 0.0
    %732 = vmatprep.subr.mxu0 0.0
    %733 = vmatpush1.msra.mxu0 0.0
    %734 = vmatprep.subr.mxu0 0.0
    %735 = vmatpush1.msra.mxu0 0.0
    %736 = vmatprep.subr.mxu0 0.0
    %737 = vmatpush1.msra.mxu0 0.0
    %738 = vmatprep.subr.mxu0 0.0
    %739 = vmatpush1.msra.mxu0 0.0
    %740 = vmatprep.subr.mxu0 0.0
    %741 = vmatpush1.msra.mxu0 0.0
    %742 = vmatprep.subr.mxu0 0.0
    %743 = vmatpush1.msra.mxu0 0.0
    %744 = vmatprep.subr.mxu0 0.0
    %745 = vmatpush1.msra.mxu0 0.0
    %746 = vmatprep.subr.mxu0 0.0
    %747 = vmatpush1.msra.mxu0 0.0
    %748 = vmatprep.subr.mxu0 0.0
    %749 = vmatpush1.msra.mxu0 0.0
    %750 = vmatprep.subr.mxu0 0.0
    %751 = vmatpush1.msra.mxu0 0.0
    %752 = vmatprep.subr.mxu0 0.0
    %753 = vmatpush1.msra.mxu0 0.0
    %754 = vmatprep.subr.mxu0 0.0
    %755 = vmatpush1.msra.mxu0 0.0
    %756 = vmatprep.subr.mxu0 0.0
    %757 = vmatpush1.msra.mxu0 0.0
    %758 = vmatprep.subr.mxu0 0.0
    %759 = vmatpush1.msra.mxu0 0.0
    %760 = vmatprep.subr.mxu0 0.0
    %761 = vmatpush1.msra.mxu0 0.0
    %762 = vmatprep.subr.mxu0 0.0
    %763 = vmatpush1.msra.mxu0 0.0
    %764 = vmatprep.mubr.f32.mxu0 0.0
    %765 = vmatmul.mubr.f32.gmra.mrb[0].mxu0 %v195
    %v766 = vpop.f32.mrb[0].mxu0
    %v767 = vadd.f32 0.0, %v766
    %v768 = vpop.f32.mrb[0].mxu0
    %769 = vmatprep.mubr.f32.mxu0 0.0
    %770 = vmatmul.mubr.f32.gmra.mrb[0].mxu0 %v198
    %v771 = vpop.f32.mrb[0].mxu0
    %v772 = vadd.f32 0.0, %v771
    %v773 = vpop.f32.mrb[0].mxu0
    %774 = vdwg.mxu0
    %v775 = vadd.f32 %v689, %v767
    %v776 = vadd.f32 %v694, %v772
    %v777 = vadd.f32 %v775, %v280
    %v778 = vadd.f32 %v776, %v285
    %v779 = vmul.f32 %v777, 0.2
    %v780 = vmul.f32 %v778, 0.2
    %v781 = vmax.f32 %v777, %v779
    %v782 = vmax.f32 %v778, %v780
    %s783 = scalar_lea.vmem [#allocation2], 32
    %784 = vst.msk [vmem:[%s783] sm:$0xff] %vm293, %v781
    %785 = vst.msk [vmem:[%s783 + $0x8] sm:$0xff] %vm293, %v782
    %s786 = scalar_lea.vmem %s0, 24
    %v787 = vld [vmem:[%s786] sm:$0xff]
    %789 = vrot.lane.b32.xlu0 %v787, 126
    %v790 = vpop.permute.xlu0 %789
    %792 = vmatprep.subr.mxu0 0.0
    %793 = vmatpush1.msra.mxu0 %v790
    %794 = vmatprep.subr.mxu0 0.0
    %795 = vmatpush1.msra.mxu0 0.0
    %796 = vmatprep.subr.mxu0 0.0
    %797 = vmatpush1.msra.mxu0 0.0
    %798 = vmatprep.subr.mxu0 0.0
    %799 = vmatpush1.msra.mxu0 0.0
    %800 = vmatprep.subr.mxu0 0.0
    %801 = vmatpush1.msra.mxu0 0.0
    %802 = vmatprep.subr.mxu0 0.0
    %803 = vmatpush1.msra.mxu0 0.0
    %804 = vmatprep.subr.mxu0 0.0
    %805 = vmatpush1.msra.mxu0 0.0
    %806 = vmatprep.subr.mxu0 0.0
    %807 = vmatpush1.msra.mxu0 0.0
    %808 = vmatprep.subr.mxu0 0.0
    %809 = vmatpush1.msra.mxu0 0.0
    %810 = vmatprep.subr.mxu0 0.0
    %811 = vmatpush1.msra.mxu0 0.0
    %812 = vmatprep.subr.mxu0 0.0
    %813 = vmatpush1.msra.mxu0 0.0
    %814 = vmatprep.subr.mxu0 0.0
    %815 = vmatpush1.msra.mxu0 0.0
    %816 = vmatprep.subr.mxu0 0.0
    %817 = vmatpush1.msra.mxu0 0.0
    %818 = vmatprep.subr.mxu0 0.0
    %819 = vmatpush1.msra.mxu0 0.0
    %820 = vmatprep.subr.mxu0 0.0
    %821 = vmatpush1.msra.mxu0 0.0
    %822 = vmatprep.subr.mxu0 0.0
    %823 = vmatpush1.msra.mxu0 0.0
    %824 = vmatprep.subr.mxu0 0.0
    %825 = vmatpush1.msra.mxu0 0.0
    %826 = vmatprep.subr.mxu0 0.0
    %827 = vmatpush1.msra.mxu0 0.0
    %828 = vmatprep.subr.mxu0 0.0
    %829 = vmatpush1.msra.mxu0 0.0
    %830 = vmatprep.subr.mxu0 0.0
    %831 = vmatpush1.msra.mxu0 0.0
    %832 = vmatprep.subr.mxu0 0.0
    %833 = vmatpush1.msra.mxu0 0.0
    %834 = vmatprep.subr.mxu0 0.0
    %835 = vmatpush1.msra.mxu0 0.0
    %836 = vmatprep.subr.mxu0 0.0
    %837 = vmatpush1.msra.mxu0 0.0
    %838 = vmatprep.subr.mxu0 0.0
    %839 = vmatpush1.msra.mxu0 0.0
    %840 = vmatprep.subr.mxu0 0.0
    %841 = vmatpush1.msra.mxu0 0.0
    %842 = vmatprep.subr.mxu0 0.0
    %843 = vmatpush1.msra.mxu0 0.0
    %844 = vmatprep.subr.mxu0 0.0
    %845 = vmatpush1.msra.mxu0 0.0
    %846 = vmatprep.subr.mxu0 0.0
    %847 = vmatpush1.msra.mxu0 0.0
    %848 = vmatprep.subr.mxu0 0.0
    %849 = vmatpush1.msra.mxu0 0.0
    %850 = vmatprep.subr.mxu0 0.0
    %851 = vmatpush1.msra.mxu0 0.0
    %852 = vmatprep.subr.mxu0 0.0
    %853 = vmatpush1.msra.mxu0 0.0
    %854 = vmatprep.subr.mxu0 0.0
    %855 = vmatpush1.msra.mxu0 0.0
    %856 = vmatprep.mubr.f32.mxu0 0.0
    %857 = vmatmul.mubr.f32.gmra.mrb[0].mxu0 %v30
    %v858 = vpop.f32.mrb[0].mxu0
    %v859 = vadd.f32 0.0, %v858
    %v860 = vpop.f32.mrb[0].mxu0
    %861 = vmatprep.mubr.f32.mxu0 0.0
    %862 = vmatmul.mubr.f32.gmra.mrb[0].mxu0 %v33
    %v863 = vpop.f32.mrb[0].mxu0
    %v864 = vadd.f32 0.0, %v863
    %v865 = vpop.f32.mrb[0].mxu0
    %866 = vdwg.mxu0
    %867 = vmatprep.subr.mxu0 0.0
    %868 = vmatpush1.msra.mxu0 %v787
    %869 = vmatprep.subr.mxu0 0.0
    %870 = vmatpush1.msra.mxu0 0.0
    %871 = vmatprep.subr.mxu0 0.0
    %872 = vmatpush1.msra.mxu0 0.0
    %873 = vmatprep.subr.mxu0 0.0
    %874 = vmatpush1.msra.mxu0 0.0
    %875 = vmatprep.subr.mxu0 0.0
    %876 = vmatpush1.msra.mxu0 0.0
    %877 = vmatprep.subr.mxu0 0.0
    %878 = vmatpush1.msra.mxu0 0.0
    %879 = vmatprep.subr.mxu0 0.0
    %880 = vmatpush1.msra.mxu0 0.0
    %881 = vmatprep.subr.mxu0 0.0
    %882 = vmatpush1.msra.mxu0 0.0
    %883 = vmatprep.subr.mxu0 0.0
    %884 = vmatpush1.msra.mxu0 0.0
    %885 = vmatprep.subr.mxu0 0.0
    %886 = vmatpush1.msra.mxu0 0.0
    %887 = vmatprep.subr.mxu0 0.0
    %888 = vmatpush1.msra.mxu0 0.0
    %889 = vmatprep.subr.mxu0 0.0
    %890 = vmatpush1.msra.mxu0 0.0
    %891 = vmatprep.subr.mxu0 0.0
    %892 = vmatpush1.msra.mxu0 0.0
    %893 = vmatprep.subr.mxu0 0.0
    %894 = vmatpush1.msra.mxu0 0.0
    %895 = vmatprep.subr.mxu0 0.0
    %896 = vmatpush1.msra.mxu0 0.0
    %897 = vmatprep.subr.mxu0 0.0
    %898 = vmatpush1.msra.mxu0 0.0
    %899 = vmatprep.subr.mxu0 0.0
    %900 = vmatpush1.msra.mxu0 0.0
    %901 = vmatprep.subr.mxu0 0.0
    %902 = vmatpush1.msra.mxu0 0.0
    %903 = vmatprep.subr.mxu0 0.0
    %904 = vmatpush1.msra.mxu0 0.0
    %905 = vmatprep.subr.mxu0 0.0
    %906 = vmatpush1.msra.mxu0 0.0
    %907 = vmatprep.subr.mxu0 0.0
    %908 = vmatpush1.msra.mxu0 0.0
    %909 = vmatprep.subr.mxu0 0.0
    %910 = vmatpush1.msra.mxu0 0.0
    %911 = vmatprep.subr.mxu0 0.0
    %912 = vmatpush1.msra.mxu0 0.0
    %913 = vmatprep.subr.mxu0 0.0
    %914 = vmatpush1.msra.mxu0 0.0
    %915 = vmatprep.subr.mxu0 0.0
    %916 = vmatpush1.msra.mxu0 0.0
    %917 = vmatprep.subr.mxu0 0.0
    %918 = vmatpush1.msra.mxu0 0.0
    %919 = vmatprep.subr.mxu0 0.0
    %920 = vmatpush1.msra.mxu0 0.0
    %921 = vmatprep.subr.mxu0 0.0
    %922 = vmatpush1.msra.mxu0 0.0
    %923 = vmatprep.subr.mxu0 0.0
    %924 = vmatpush1.msra.mxu0 0.0
    %925 = vmatprep.subr.mxu0 0.0
    %926 = vmatpush1.msra.mxu0 0.0
    %927 = vmatprep.subr.mxu0 0.0
    %928 = vmatpush1.msra.mxu0 0.0
    %929 = vmatprep.subr.mxu0 0.0
    %930 = vmatpush1.msra.mxu0 0.0
    %931 = vmatprep.mubr.f32.mxu0 0.0
    %932 = vmatmul.mubr.f32.gmra.mrb[0].mxu0 %v111
    %v933 = vpop.f32.mrb[0].mxu0
    %v934 = vadd.f32 %v859, %v933
    %v935 = vpop.f32.mrb[0].mxu0
    %936 = vmatprep.mubr.f32.mxu0 0.0
    %937 = vmatmul.mubr.f32.gmra.mrb[0].mxu0 %v114
    %v938 = vpop.f32.mrb[0].mxu0
    %v939 = vadd.f32 %v864, %v938
    %v940 = vpop.f32.mrb[0].mxu0
    %941 = vdwg.mxu0
    %942 = vrot.lane.b32.xlu0 %v787, 124
    %v943 = vpop.permute.xlu0 %942
    %945 = vmatprep.subr.mxu0 0.0
    %946 = vmatpush1.msra.mxu0 %v943
    %947 = vmatprep.subr.mxu0 0.0
    %948 = vmatpush1.msra.mxu0 0.0
    %949 = vmatprep.subr.mxu0 0.0
    %950 = vmatpush1.msra.mxu0 0.0
    %951 = vmatprep.subr.mxu0 0.0
    %952 = vmatpush1.msra.mxu0 0.0
    %953 = vmatprep.subr.mxu0 0.0
    %954 = vmatpush1.msra.mxu0 0.0
    %955 = vmatprep.subr.mxu0 0.0
    %956 = vmatpush1.msra.mxu0 0.0
    %957 = vmatprep.subr.mxu0 0.0
    %958 = vmatpush1.msra.mxu0 0.0
    %959 = vmatprep.subr.mxu0 0.0
    %960 = vmatpush1.msra.mxu0 0.0
    %961 = vmatprep.subr.mxu0 0.0
    %962 = vmatpush1.msra.mxu0 0.0
    %963 = vmatprep.subr.mxu0 0.0
    %964 = vmatpush1.msra.mxu0 0.0
    %965 = vmatprep.subr.mxu0 0.0
    %966 = vmatpush1.msra.mxu0 0.0
    %967 = vmatprep.subr.mxu0 0.0
    %968 = vmatpush1.msra.mxu0 0.0
    %969 = vmatprep.subr.mxu0 0.0
    %970 = vmatpush1.msra.mxu0 0.0
    %971 = vmatprep.subr.mxu0 0.0
    %972 = vmatpush1.msra.mxu0 0.0
    %973 = vmatprep.subr.mxu0 0.0
    %974 = vmatpush1.msra.mxu0 0.0
    %975 = vmatprep.subr.mxu0 0.0
    %976 = vmatpush1.msra.mxu0 0.0
    %977 = vmatprep.subr.mxu0 0.0
    %978 = vmatpush1.msra.mxu0 0.0
    %979 = vmatprep.subr.mxu0 0.0
    %980 = vmatpush1.msra.mxu0 0.0
    %981 = vmatprep.subr.mxu0 0.0
    %982 = vmatpush1.msra.mxu0 0.0
    %983 = vmatprep.subr.mxu0 0.0
    %984 = vmatpush1.msra.mxu0 0.0
    %985 = vmatprep.subr.mxu0 0.0
    %986 = vmatpush1.msra.mxu0 0.0
    %987 = vmatprep.subr.mxu0 0.0
    %988 = vmatpush1.msra.mxu0 0.0
    %989 = vmatprep.subr.mxu0 0.0
    %990 = vmatpush1.msra.mxu0 0.0
    %991 = vmatprep.subr.mxu0 0.0
    %992 = vmatpush1.msra.mxu0 0.0
    %993 = vmatprep.subr.mxu0 0.0
    %994 = vmatpush1.msra.mxu0 0.0
    %995 = vmatprep.subr.mxu0 0.0
    %996 = vmatpush1.msra.mxu0 0.0
    %997 = vmatprep.subr.mxu0 0.0
    %998 = vmatpush1.msra.mxu0 0.0
    %999 = vmatprep.subr.mxu0 0.0
    %1000 = vmatpush1.msra.mxu0 0.0
    %1001 = vmatprep.subr.mxu0 0.0
    %1002 = vmatpush1.msra.mxu0 0.0
    %1003 = vmatprep.subr.mxu0 0.0
    %1004 = vmatpush1.msra.mxu0 0.0
    %1005 = vmatprep.subr.mxu0 0.0
    %1006 = vmatpush1.msra.mxu0 0.0
    %1007 = vmatprep.subr.mxu0 0.0
    %1008 = vmatpush1.msra.mxu0 0.0
    %1009 = vmatprep.mubr.f32.mxu0 0.0
    %1010 = vmatmul.mubr.f32.gmra.mrb[0].mxu0 %v195
    %v1011 = vpop.f32.mrb[0].mxu0
    %v1012 = vadd.f32 0.0, %v1011
    %v1013 = vpop.f32.mrb[0].mxu0
    %1014 = vmatprep.mubr.f32.mxu0 0.0
    %1015 = vmatmul.mubr.f32.gmra.mrb[0].mxu0 %v198
    %v1016 = vpop.f32.mrb[0].mxu0
    %v1017 = vadd.f32 0.0, %v1016
    %v1018 = vpop.f32.mrb[0].mxu0
    %1019 = vdwg.mxu0
    %v1020 = vadd.f32 %v934, %v1012
    %v1021 = vadd.f32 %v939, %v1017
    %v1022 = vadd.f32 %v1020, %v280
    %v1023 = vadd.f32 %v1021, %v285
    %v1024 = vmul.f32 %v1022, 0.2
    %v1025 = vmul.f32 %v1023, 0.2
    %v1026 = vmax.f32 %v1022, %v1024
    %v1027 = vmax.f32 %v1023, %v1025
    %s1028 = scalar_lea.vmem [#allocation2], 48
    %1029 = vst.msk [vmem:[%s1028] sm:$0xff] %vm293, %v1026
    %1030 = vst.msk [vmem:[%s1028 + $0x8] sm:$0xff] %vm293, %v1027
    %s1031 = scalar_lea.vmem %s0, 32
    %v1032 = vld [vmem:[%s1031] sm:$0xff]
    %1034 = vrot.lane.b32.xlu0 %v1032, 126
    %v1035 = vpop.permute.xlu0 %1034
    %1037 = vmatprep.subr.mxu0 0.0
    %1038 = vmatpush1.msra.mxu0 %v1035
    %1039 = vmatprep.subr.mxu0 0.0
    %1040 = vmatpush1.msra.mxu0 0.0
    %1041 = vmatprep.subr.mxu0 0.0
    %1042 = vmatpush1.msra.mxu0 0.0
    %1043 = vmatprep.subr.mxu0 0.0
    %1044 = vmatpush1.msra.mxu0 0.0
    %1045 = vmatprep.subr.mxu0 0.0
    %1046 = vmatpush1.msra.mxu0 0.0
    %1047 = vmatprep.subr.mxu0 0.0
    %1048 = vmatpush1.msra.mxu0 0.0
    %1049 = vmatprep.subr.mxu0 0.0
    %1050 = vmatpush1.msra.mxu0 0.0
    %1051 = vmatprep.subr.mxu0 0.0
    %1052 = vmatpush1.msra.mxu0 0.0
    %1053 = vmatprep.subr.mxu0 0.0
    %1054 = vmatpush1.msra.mxu0 0.0
    %1055 = vmatprep.subr.mxu0 0.0
    %1056 = vmatpush1.msra.mxu0 0.0
    %1057 = vmatprep.subr.mxu0 0.0
    %1058 = vmatpush1.msra.mxu0 0.0
    %1059 = vmatprep.subr.mxu0 0.0
    %1060 = vmatpush1.msra.mxu0 0.0
    %1061 = vmatprep.subr.mxu0 0.0
    %1062 = vmatpush1.msra.mxu0 0.0
    %1063 = vmatprep.subr.mxu0 0.0
    %1064 = vmatpush1.msra.mxu0 0.0
    %1065 = vmatprep.subr.mxu0 0.0
    %1066 = vmatpush1.msra.mxu0 0.0
    %1067 = vmatprep.subr.mxu0 0.0
    %1068 = vmatpush1.msra.mxu0 0.0
    %1069 = vmatprep.subr.mxu0 0.0
    %1070 = vmatpush1.msra.mxu0 0.0
    %1071 = vmatprep.subr.mxu0 0.0
    %1072 = vmatpush1.msra.mxu0 0.0
    %1073 = vmatprep.subr.mxu0 0.0
    %1074 = vmatpush1.msra.mxu0 0.0
    %1075 = vmatprep.subr.mxu0 0.0
    %1076 = vmatpush1.msra.mxu0 0.0
    %1077 = vmatprep.subr.mxu0 0.0
    %1078 = vmatpush1.msra.mxu0 0.0
    %1079 = vmatprep.subr.mxu0 0.0
    %1080 = vmatpush1.msra.mxu0 0.0
    %1081 = vmatprep.subr.mxu0 0.0
    %1082 = vmatpush1.msra.mxu0 0.0
    %1083 = vmatprep.subr.mxu0 0.0
    %1084 = vmatpush1.msra.mxu0 0.0
    %1085 = vmatprep.subr.mxu0 0.0
    %1086 = vmatpush1.msra.mxu0 0.0
    %1087 = vmatprep.subr.mxu0 0.0
    %1088 = vmatpush1.msra.mxu0 0.0
    %1089 = vmatprep.subr.mxu0 0.0
    %1090 = vmatpush1.msra.mxu0 0.0
    %1091 = vmatprep.subr.mxu0 0.0
    %1092 = vmatpush1.msra.mxu0 0.0
    %1093 = vmatprep.subr.mxu0 0.0
    %1094 = vmatpush1.msra.mxu0 0.0
    %1095 = vmatprep.subr.mxu0 0.0
    %1096 = vmatpush1.msra.mxu0 0.0
    %1097 = vmatprep.subr.mxu0 0.0
    %1098 = vmatpush1.msra.mxu0 0.0
    %1099 = vmatprep.subr.mxu0 0.0
    %1100 = vmatpush1.msra.mxu0 0.0
    %1101 = vmatprep.mubr.f32.mxu0 0.0
    %1102 = vmatmul.mubr.f32.gmra.mrb[0].mxu0 %v30
    %v1103 = vpop.f32.mrb[0].mxu0
    %v1104 = vadd.f32 0.0, %v1103
    %v1105 = vpop.f32.mrb[0].mxu0
    %1106 = vmatprep.mubr.f32.mxu0 0.0
    %1107 = vmatmul.mubr.f32.gmra.mrb[0].mxu0 %v33
    %v1108 = vpop.f32.mrb[0].mxu0
    %v1109 = vadd.f32 0.0, %v1108
    %v1110 = vpop.f32.mrb[0].mxu0
    %1111 = vdwg.mxu0
    %1112 = vmatprep.subr.mxu0 0.0
    %1113 = vmatpush1.msra.mxu0 %v1032
    %1114 = vmatprep.subr.mxu0 0.0
    %1115 = vmatpush1.msra.mxu0 0.0
    %1116 = vmatprep.subr.mxu0 0.0
    %1117 = vmatpush1.msra.mxu0 0.0
    %1118 = vmatprep.subr.mxu0 0.0
    %1119 = vmatpush1.msra.mxu0 0.0
    %1120 = vmatprep.subr.mxu0 0.0
    %1121 = vmatpush1.msra.mxu0 0.0
    %1122 = vmatprep.subr.mxu0 0.0
    %1123 = vmatpush1.msra.mxu0 0.0
    %1124 = vmatprep.subr.mxu0 0.0
    %1125 = vmatpush1.msra.mxu0 0.0
    %1126 = vmatprep.subr.mxu0 0.0
    %1127 = vmatpush1.msra.mxu0 0.0
    %1128 = vmatprep.subr.mxu0 0.0
    %1129 = vmatpush1.msra.mxu0 0.0
    %1130 = vmatprep.subr.mxu0 0.0
    %1131 = vmatpush1.msra.mxu0 0.0
    %1132 = vmatprep.subr.mxu0 0.0
    %1133 = vmatpush1.msra.mxu0 0.0
    %1134 = vmatprep.subr.mxu0 0.0
    %1135 = vmatpush1.msra.mxu0 0.0
    %1136 = vmatprep.subr.mxu0 0.0
    %1137 = vmatpush1.msra.mxu0 0.0
    %1138 = vmatprep.subr.mxu0 0.0
    %1139 = vmatpush1.msra.mxu0 0.0
    %1140 = vmatprep.subr.mxu0 0.0
    %1141 = vmatpush1.msra.mxu0 0.0
    %1142 = vmatprep.subr.mxu0 0.0
    %1143 = vmatpush1.msra.mxu0 0.0
    %1144 = vmatprep.subr.mxu0 0.0
    %1145 = vmatpush1.msra.mxu0 0.0
    %1146 = vmatprep.subr.mxu0 0.0
    %1147 = vmatpush1.msra.mxu0 0.0
    %1148 = vmatprep.subr.mxu0 0.0
    %1149 = vmatpush1.msra.mxu0 0.0
    %1150 = vmatprep.subr.mxu0 0.0
    %1151 = vmatpush1.msra.mxu0 0.0
    %1152 = vmatprep.subr.mxu0 0.0
    %1153 = vmatpush1.msra.mxu0 0.0
    %1154 = vmatprep.subr.mxu0 0.0
    %1155 = vmatpush1.msra.mxu0 0.0
    %1156 = vmatprep.subr.mxu0 0.0
    %1157 = vmatpush1.msra.mxu0 0.0
    %1158 = vmatprep.subr.mxu0 0.0
    %1159 = vmatpush1.msra.mxu0 0.0
    %1160 = vmatprep.subr.mxu0 0.0
    %1161 = vmatpush1.msra.mxu0 0.0
    %1162 = vmatprep.subr.mxu0 0.0
    %1163 = vmatpush1.msra.mxu0 0.0
    %1164 = vmatprep.subr.mxu0 0.0
    %1165 = vmatpush1.msra.mxu0 0.0
    %1166 = vmatprep.subr.mxu0 0.0
    %1167 = vmatpush1.msra.mxu0 0.0
    %1168 = vmatprep.subr.mxu0 0.0
    %1169 = vmatpush1.msra.mxu0 0.0
    %1170 = vmatprep.subr.mxu0 0.0
    %1171 = vmatpush1.msra.mxu0 0.0
    %1172 = vmatprep.subr.mxu0 0.0
    %1173 = vmatpush1.msra.mxu0 0.0
    %1174 = vmatprep.subr.mxu0 0.0
    %1175 = vmatpush1.msra.mxu0 0.0
    %1176 = vmatprep.mubr.f32.mxu0 0.0
    %1177 = vmatmul.mubr.f32.gmra.mrb[0].mxu0 %v111
    %v1178 = vpop.f32.mrb[0].mxu0
    %v1179 = vadd.f32 %v1104, %v1178
    %v1180 = vpop.f32.mrb[0].mxu0
    %1181 = vmatprep.mubr.f32.mxu0 0.0
    %1182 = vmatmul.mubr.f32.gmra.mrb[0].mxu0 %v114
    %v1183 = vpop.f32.mrb[0].mxu0
    %v1184 = vadd.f32 %v1109, %v1183
    %v1185 = vpop.f32.mrb[0].mxu0
    %1186 = vdwg.mxu0
    %1187 = vrot.lane.b32.xlu0 %v1032, 124
    %v1188 = vpop.permute.xlu0 %1187
    %1190 = vmatprep.subr.mxu0 0.0
    %1191 = vmatpush1.msra.mxu0 %v1188
    %1192 = vmatprep.subr.mxu0 0.0
    %1193 = vmatpush1.msra.mxu0 0.0
    %1194 = vmatprep.subr.mxu0 0.0
    %1195 = vmatpush1.msra.mxu0 0.0
    %1196 = vmatprep.subr.mxu0 0.0
    %1197 = vmatpush1.msra.mxu0 0.0
    %1198 = vmatprep.subr.mxu0 0.0
    %1199 = vmatpush1.msra.mxu0 0.0
    %1200 = vmatprep.subr.mxu0 0.0
    %1201 = vmatpush1.msra.mxu0 0.0
    %1202 = vmatprep.subr.mxu0 0.0
    %1203 = vmatpush1.msra.mxu0 0.0
    %1204 = vmatprep.subr.mxu0 0.0
    %1205 = vmatpush1.msra.mxu0 0.0
    %1206 = vmatprep.subr.mxu0 0.0
    %1207 = vmatpush1.msra.mxu0 0.0
    %1208 = vmatprep.subr.mxu0 0.0
    %1209 = vmatpush1.msra.mxu0 0.0
    %1210 = vmatprep.subr.mxu0 0.0
    %1211 = vmatpush1.msra.mxu0 0.0
    %1212 = vmatprep.subr.mxu0 0.0
    %1213 = vmatpush1.msra.mxu0 0.0
    %1214 = vmatprep.subr.mxu0 0.0
    %1215 = vmatpush1.msra.mxu0 0.0
    %1216 = vmatprep.subr.mxu0 0.0
    %1217 = vmatpush1.msra.mxu0 0.0
    %1218 = vmatprep.subr.mxu0 0.0
    %1219 = vmatpush1.msra.mxu0 0.0
    %1220 = vmatprep.subr.mxu0 0.0
    %1221 = vmatpush1.msra.mxu0 0.0
    %1222 = vmatprep.subr.mxu0 0.0
    %1223 = vmatpush1.msra.mxu0 0.0
    %1224 = vmatprep.subr.mxu0 0.0
    %1225 = vmatpush1.msra.mxu0 0.0
    %1226 = vmatprep.subr.mxu0 0.0
    %1227 = vmatpush1.msra.mxu0 0.0
    %1228 = vmatprep.subr.mxu0 0.0
    %1229 = vmatpush1.msra.mxu0 0.0
    %1230 = vmatprep.subr.mxu0 0.0
    %1231 = vmatpush1.msra.mxu0 0.0
    %1232 = vmatprep.subr.mxu0 0.0
    %1233 = vmatpush1.msra.mxu0 0.0
    %1234 = vmatprep.subr.mxu0 0.0
    %1235 = vmatpush1.msra.mxu0 0.0
    %1236 = vmatprep.subr.mxu0 0.0
    %1237 = vmatpush1.msra.mxu0 0.0
    %1238 = vmatprep.subr.mxu0 0.0
    %1239 = vmatpush1.msra.mxu0 0.0
    %1240 = vmatprep.subr.mxu0 0.0
    %1241 = vmatpush1.msra.mxu0 0.0
    %1242 = vmatprep.subr.mxu0 0.0
    %1243 = vmatpush1.msra.mxu0 0.0
    %1244 = vmatprep.subr.mxu0 0.0
    %1245 = vmatpush1.msra.mxu0 0.0
    %1246 = vmatprep.subr.mxu0 0.0
    %1247 = vmatpush1.msra.mxu0 0.0
    %1248 = vmatprep.subr.mxu0 0.0
    %1249 = vmatpush1.msra.mxu0 0.0
    %1250 = vmatprep.subr.mxu0 0.0
    %1251 = vmatpush1.msra.mxu0 0.0
    %1252 = vmatprep.subr.mxu0 0.0
    %1253 = vmatpush1.msra.mxu0 0.0
    %1254 = vmatprep.mubr.f32.mxu0 0.0
    %1255 = vmatmul.mubr.f32.gmra.mrb[0].mxu0 %v195
    %v1256 = vpop.f32.mrb[0].mxu0
    %v1257 = vadd.f32 0.0, %v1256
    %v1258 = vpop.f32.mrb[0].mxu0
    %1259 = vmatprep.mubr.f32.mxu0 0.0
    %1260 = vmatmul.mubr.f32.gmra.mrb[0].mxu0 %v198
    %v1261 = vpop.f32.mrb[0].mxu0
    %v1262 = vadd.f32 0.0, %v1261
    %v1263 = vpop.f32.mrb[0].mxu0
    %1264 = vdwg.mxu0
    %v1265 = vadd.f32 %v1179, %v1257
    %v1266 = vadd.f32 %v1184, %v1262
    %v1267 = vadd.f32 %v1265, %v280
    %v1268 = vadd.f32 %v1266, %v285
    %v1269 = vmul.f32 %v1267, 0.2
    %v1270 = vmul.f32 %v1268, 0.2
    %v1271 = vmax.f32 %v1267, %v1269
    %v1272 = vmax.f32 %v1268, %v1270
    %s1273 = scalar_lea.vmem [#allocation2], 64
    %1274 = vst.msk [vmem:[%s1273] sm:$0xff] %vm293, %v1271
    %1275 = vst.msk [vmem:[%s1273 + $0x8] sm:$0xff] %vm293, %v1272
    %s1276 = scalar_lea.vmem %s0, 40
    %v1277 = vld [vmem:[%s1276] sm:$0xff]
    %1279 = vrot.lane.b32.xlu0 %v1277, 126
    %v1280 = vpop.permute.xlu0 %1279
    %1282 = vmatprep.subr.mxu0 0.0
    %1283 = vmatpush1.msra.mxu0 %v1280
    %1284 = vmatprep.subr.mxu0 0.0
    %1285 = vmatpush1.msra.mxu0 0.0
    %1286 = vmatprep.subr.mxu0 0.0
    %1287 = vmatpush1.msra.mxu0 0.0
    %1288 = vmatprep.subr.mxu0 0.0
    %1289 = vmatpush1.msra.mxu0 0.0
    %1290 = vmatprep.subr.mxu0 0.0
    %1291 = vmatpush1.msra.mxu0 0.0
    %1292 = vmatprep.subr.mxu0 0.0
    %1293 = vmatpush1.msra.mxu0 0.0
    %1294 = vmatprep.subr.mxu0 0.0
    %1295 = vmatpush1.msra.mxu0 0.0
    %1296 = vmatprep.subr.mxu0 0.0
    %1297 = vmatpush1.msra.mxu0 0.0
    %1298 = vmatprep.subr.mxu0 0.0
    %1299 = vmatpush1.msra.mxu0 0.0
    %1300 = vmatprep.subr.mxu0 0.0
    %1301 = vmatpush1.msra.mxu0 0.0
    %1302 = vmatprep.subr.mxu0 0.0
    %1303 = vmatpush1.msra.mxu0 0.0
    %1304 = vmatprep.subr.mxu0 0.0
    %1305 = vmatpush1.msra.mxu0 0.0
    %1306 = vmatprep.subr.mxu0 0.0
    %1307 = vmatpush1.msra.mxu0 0.0
    %1308 = vmatprep.subr.mxu0 0.0
    %1309 = vmatpush1.msra.mxu0 0.0
    %1310 = vmatprep.subr.mxu0 0.0
    %1311 = vmatpush1.msra.mxu0 0.0
    %1312 = vmatprep.subr.mxu0 0.0
    %1313 = vmatpush1.msra.mxu0 0.0
    %1314 = vmatprep.subr.mxu0 0.0
    %1315 = vmatpush1.msra.mxu0 0.0
    %1316 = vmatprep.subr.mxu0 0.0
    %1317 = vmatpush1.msra.mxu0 0.0
    %1318 = vmatprep.subr.mxu0 0.0
    %1319 = vmatpush1.msra.mxu0 0.0
    %1320 = vmatprep.subr.mxu0 0.0
    %1321 = vmatpush1.msra.mxu0 0.0
    %1322 = vmatprep.subr.mxu0 0.0
    %1323 = vmatpush1.msra.mxu0 0.0
    %1324 = vmatprep.subr.mxu0 0.0
    %1325 = vmatpush1.msra.mxu0 0.0
    %1326 = vmatprep.subr.mxu0 0.0
    %1327 = vmatpush1.msra.mxu0 0.0
    %1328 = vmatprep.subr.mxu0 0.0
    %1329 = vmatpush1.msra.mxu0 0.0
    %1330 = vmatprep.subr.mxu0 0.0
    %1331 = vmatpush1.msra.mxu0 0.0
    %1332 = vmatprep.subr.mxu0 0.0
    %1333 = vmatpush1.msra.mxu0 0.0
    %1334 = vmatprep.subr.mxu0 0.0
    %1335 = vmatpush1.msra.mxu0 0.0
    %1336 = vmatprep.subr.mxu0 0.0
    %1337 = vmatpush1.msra.mxu0 0.0
    %1338 = vmatprep.subr.mxu0 0.0
    %1339 = vmatpush1.msra.mxu0 0.0
    %1340 = vmatprep.subr.mxu0 0.0
    %1341 = vmatpush1.msra.mxu0 0.0
    %1342 = vmatprep.subr.mxu0 0.0
    %1343 = vmatpush1.msra.mxu0 0.0
    %1344 = vmatprep.subr.mxu0 0.0
    %1345 = vmatpush1.msra.mxu0 0.0
    %1346 = vmatprep.mubr.f32.mxu0 0.0
    %1347 = vmatmul.mubr.f32.gmra.mrb[0].mxu0 %v30
    %v1348 = vpop.f32.mrb[0].mxu0
    %v1349 = vadd.f32 0.0, %v1348
    %v1350 = vpop.f32.mrb[0].mxu0
    %1351 = vmatprep.mubr.f32.mxu0 0.0
    %1352 = vmatmul.mubr.f32.gmra.mrb[0].mxu0 %v33
    %v1353 = vpop.f32.mrb[0].mxu0
    %v1354 = vadd.f32 0.0, %v1353
    %v1355 = vpop.f32.mrb[0].mxu0
    %1356 = vdwg.mxu0
    %1357 = vmatprep.subr.mxu0 0.0
    %1358 = vmatpush1.msra.mxu0 %v1277
    %1359 = vmatprep.subr.mxu0 0.0
    %1360 = vmatpush1.msra.mxu0 0.0
    %1361 = vmatprep.subr.mxu0 0.0
    %1362 = vmatpush1.msra.mxu0 0.0
    %1363 = vmatprep.subr.mxu0 0.0
    %1364 = vmatpush1.msra.mxu0 0.0
    %1365 = vmatprep.subr.mxu0 0.0
    %1366 = vmatpush1.msra.mxu0 0.0
    %1367 = vmatprep.subr.mxu0 0.0
    %1368 = vmatpush1.msra.mxu0 0.0
    %1369 = vmatprep.subr.mxu0 0.0
    %1370 = vmatpush1.msra.mxu0 0.0
    %1371 = vmatprep.subr.mxu0 0.0
    %1372 = vmatpush1.msra.mxu0 0.0
    %1373 = vmatprep.subr.mxu0 0.0
    %1374 = vmatpush1.msra.mxu0 0.0
    %1375 = vmatprep.subr.mxu0 0.0
    %1376 = vmatpush1.msra.mxu0 0.0
    %1377 = vmatprep.subr.mxu0 0.0
    %1378 = vmatpush1.msra.mxu0 0.0
    %1379 = vmatprep.subr.mxu0 0.0
    %1380 = vmatpush1.msra.mxu0 0.0
    %1381 = vmatprep.subr.mxu0 0.0
    %1382 = vmatpush1.msra.mxu0 0.0
    %1383 = vmatprep.subr.mxu0 0.0
    %1384 = vmatpush1.msra.mxu0 0.0
    %1385 = vmatprep.subr.mxu0 0.0
    %1386 = vmatpush1.msra.mxu0 0.0
    %1387 = vmatprep.subr.mxu0 0.0
    %1388 = vmatpush1.msra.mxu0 0.0
    %1389 = vmatprep.subr.mxu0 0.0
    %1390 = vmatpush1.msra.mxu0 0.0
    %1391 = vmatprep.subr.mxu0 0.0
    %1392 = vmatpush1.msra.mxu0 0.0
    %1393 = vmatprep.subr.mxu0 0.0
    %1394 = vmatpush1.msra.mxu0 0.0
    %1395 = vmatprep.subr.mxu0 0.0
    %1396 = vmatpush1.msra.mxu0 0.0
    %1397 = vmatprep.subr.mxu0 0.0
    %1398 = vmatpush1.msra.mxu0 0.0
    %1399 = vmatprep.subr.mxu0 0.0
    %1400 = vmatpush1.msra.mxu0 0.0
    %1401 = vmatprep.subr.mxu0 0.0
    %1402 = vmatpush1.msra.mxu0 0.0
    %1403 = vmatprep.subr.mxu0 0.0
    %1404 = vmatpush1.msra.mxu0 0.0
    %1405 = vmatprep.subr.mxu0 0.0
    %1406 = vmatpush1.msra.mxu0 0.0
    %1407 = vmatprep.subr.mxu0 0.0
    %1408 = vmatpush1.msra.mxu0 0.0
    %1409 = vmatprep.subr.mxu0 0.0
    %1410 = vmatpush1.msra.mxu0 0.0
    %1411 = vmatprep.subr.mxu0 0.0
    %1412 = vmatpush1.msra.mxu0 0.0
    %1413 = vmatprep.subr.mxu0 0.0
    %1414 = vmatpush1.msra.mxu0 0.0
    %1415 = vmatprep.subr.mxu0 0.0
    %1416 = vmatpush1.msra.mxu0 0.0
    %1417 = vmatprep.subr.mxu0 0.0
    %1418 = vmatpush1.msra.mxu0 0.0
    %1419 = vmatprep.subr.mxu0 0.0
    %1420 = vmatpush1.msra.mxu0 0.0
    %1421 = vmatprep.mubr.f32.mxu0 0.0
    %1422 = vmatmul.mubr.f32.gmra.mrb[0].mxu0 %v111
    %v1423 = vpop.f32.mrb[0].mxu0
    %v1424 = vadd.f32 %v1349, %v1423
    %v1425 = vpop.f32.mrb[0].mxu0
    %1426 = vmatprep.mubr.f32.mxu0 0.0
    %1427 = vmatmul.mubr.f32.gmra.mrb[0].mxu0 %v114
    %v1428 = vpop.f32.mrb[0].mxu0
    %v1429 = vadd.f32 %v1354, %v1428
    %v1430 = vpop.f32.mrb[0].mxu0
    %1431 = vdwg.mxu0
    %1432 = vrot.lane.b32.xlu0 %v1277, 124
    %v1433 = vpop.permute.xlu0 %1432
    %1435 = vmatprep.subr.mxu0 0.0
    %1436 = vmatpush1.msra.mxu0 %v1433
    %1437 = vmatprep.subr.mxu0 0.0
    %1438 = vmatpush1.msra.mxu0 0.0
    %1439 = vmatprep.subr.mxu0 0.0
    %1440 = vmatpush1.msra.mxu0 0.0
    %1441 = vmatprep.subr.mxu0 0.0
    %1442 = vmatpush1.msra.mxu0 0.0
    %1443 = vmatprep.subr.mxu0 0.0
    %1444 = vmatpush1.msra.mxu0 0.0
    %1445 = vmatprep.subr.mxu0 0.0
    %1446 = vmatpush1.msra.mxu0 0.0
    %1447 = vmatprep.subr.mxu0 0.0
    %1448 = vmatpush1.msra.mxu0 0.0
    %1449 = vmatprep.subr.mxu0 0.0
    %1450 = vmatpush1.msra.mxu0 0.0
    %1451 = vmatprep.subr.mxu0 0.0
    %1452 = vmatpush1.msra.mxu0 0.0
    %1453 = vmatprep.subr.mxu0 0.0
    %1454 = vmatpush1.msra.mxu0 0.0
    %1455 = vmatprep.subr.mxu0 0.0
    %1456 = vmatpush1.msra.mxu0 0.0
    %1457 = vmatprep.subr.mxu0 0.0
    %1458 = vmatpush1.msra.mxu0 0.0
    %1459 = vmatprep.subr.mxu0 0.0
    %1460 = vmatpush1.msra.mxu0 0.0
    %1461 = vmatprep.subr.mxu0 0.0
    %1462 = vmatpush1.msra.mxu0 0.0
    %1463 = vmatprep.subr.mxu0 0.0
    %1464 = vmatpush1.msra.mxu0 0.0
    %1465 = vmatprep.subr.mxu0 0.0
    %1466 = vmatpush1.msra.mxu0 0.0
    %1467 = vmatprep.subr.mxu0 0.0
    %1468 = vmatpush1.msra.mxu0 0.0
    %1469 = vmatprep.subr.mxu0 0.0
    %1470 = vmatpush1.msra.mxu0 0.0
    %1471 = vmatprep.subr.mxu0 0.0
    %1472 = vmatpush1.msra.mxu0 0.0
    %1473 = vmatprep.subr.mxu0 0.0
    %1474 = vmatpush1.msra.mxu0 0.0
    %1475 = vmatprep.subr.mxu0 0.0
    %1476 = vmatpush1.msra.mxu0 0.0
    %1477 = vmatprep.subr.mxu0 0.0
    %1478 = vmatpush1.msra.mxu0 0.0
    %1479 = vmatprep.subr.mxu0 0.0
    %1480 = vmatpush1.msra.mxu0 0.0
    %1481 = vmatprep.subr.mxu0 0.0
    %1482 = vmatpush1.msra.mxu0 0.0
    %1483 = vmatprep.subr.mxu0 0.0
    %1484 = vmatpush1.msra.mxu0 0.0
    %1485 = vmatprep.subr.mxu0 0.0
    %1486 = vmatpush1.msra.mxu0 0.0
    %1487 = vmatprep.subr.mxu0 0.0
    %1488 = vmatpush1.msra.mxu0 0.0
    %1489 = vmatprep.subr.mxu0 0.0
    %1490 = vmatpush1.msra.mxu0 0.0
    %1491 = vmatprep.subr.mxu0 0.0
    %1492 = vmatpush1.msra.mxu0 0.0
    %1493 = vmatprep.subr.mxu0 0.0
    %1494 = vmatpush1.msra.mxu0 0.0
    %1495 = vmatprep.subr.mxu0 0.0
    %1496 = vmatpush1.msra.mxu0 0.0
    %1497 = vmatprep.subr.mxu0 0.0
    %1498 = vmatpush1.msra.mxu0 0.0
    %1499 = vmatprep.mubr.f32.mxu0 0.0
    %1500 = vmatmul.mubr.f32.gmra.mrb[0].mxu0 %v195
    %v1501 = vpop.f32.mrb[0].mxu0
    %v1502 = vadd.f32 0.0, %v1501
    %v1503 = vpop.f32.mrb[0].mxu0
    %1504 = vmatprep.mubr.f32.mxu0 0.0
    %1505 = vmatmul.mubr.f32.gmra.mrb[0].mxu0 %v198
    %v1506 = vpop.f32.mrb[0].mxu0
    %v1507 = vadd.f32 0.0, %v1506
    %v1508 = vpop.f32.mrb[0].mxu0
    %1509 = vdwg.mxu0
    %v1510 = vadd.f32 %v1424, %v1502
    %v1511 = vadd.f32 %v1429, %v1507
    %v1512 = vadd.f32 %v1510, %v280
    %v1513 = vadd.f32 %v1511, %v285
    %v1514 = vmul.f32 %v1512, 0.2
    %v1515 = vmul.f32 %v1513, 0.2
    %v1516 = vmax.f32 %v1512, %v1514
    %v1517 = vmax.f32 %v1513, %v1515
    %s1518 = scalar_lea.vmem [#allocation2], 80
    %1519 = vst.msk [vmem:[%s1518] sm:$0xff] %vm293, %v1516
    %1520 = vst.msk [vmem:[%s1518 + $0x8] sm:$0xff] %vm293, %v1517
    %s1521 = scalar_lea.vmem %s0, 48
    %v1522 = vld [vmem:[%s1521] sm:$0xff]
    %1524 = vrot.lane.b32.xlu0 %v1522, 126
    %v1525 = vpop.permute.xlu0 %1524
    %1527 = vmatprep.subr.mxu0 0.0
    %1528 = vmatpush1.msra.mxu0 %v1525
    %1529 = vmatprep.subr.mxu0 0.0
    %1530 = vmatpush1.msra.mxu0 0.0
    %1531 = vmatprep.subr.mxu0 0.0
    %1532 = vmatpush1.msra.mxu0 0.0
    %1533 = vmatprep.subr.mxu0 0.0
    %1534 = vmatpush1.msra.mxu0 0.0
    %1535 = vmatprep.subr.mxu0 0.0
    %1536 = vmatpush1.msra.mxu0 0.0
    %1537 = vmatprep.subr.mxu0 0.0
    %1538 = vmatpush1.msra.mxu0 0.0
    %1539 = vmatprep.subr.mxu0 0.0
    %1540 = vmatpush1.msra.mxu0 0.0
    %1541 = vmatprep.subr.mxu0 0.0
    %1542 = vmatpush1.msra.mxu0 0.0
    %1543 = vmatprep.subr.mxu0 0.0
    %1544 = vmatpush1.msra.mxu0 0.0
    %1545 = vmatprep.subr.mxu0 0.0
    %1546 = vmatpush1.msra.mxu0 0.0
    %1547 = vmatprep.subr.mxu0 0.0
    %1548 = vmatpush1.msra.mxu0 0.0
    %1549 = vmatprep.subr.mxu0 0.0
    %1550 = vmatpush1.msra.mxu0 0.0
    %1551 = vmatprep.subr.mxu0 0.0
    %1552 = vmatpush1.msra.mxu0 0.0
    %1553 = vmatprep.subr.mxu0 0.0
    %1554 = vmatpush1.msra.mxu0 0.0
    %1555 = vmatprep.subr.mxu0 0.0
    %1556 = vmatpush1.msra.mxu0 0.0
    %1557 = vmatprep.subr.mxu0 0.0
    %1558 = vmatpush1.msra.mxu0 0.0
    %1559 = vmatprep.subr.mxu0 0.0
    %1560 = vmatpush1.msra.mxu0 0.0
    %1561 = vmatprep.subr.mxu0 0.0
    %1562 = vmatpush1.msra.mxu0 0.0
    %1563 = vmatprep.subr.mxu0 0.0
    %1564 = vmatpush1.msra.mxu0 0.0
    %1565 = vmatprep.subr.mxu0 0.0
    %1566 = vmatpush1.msra.mxu0 0.0
    %1567 = vmatprep.subr.mxu0 0.0
    %1568 = vmatpush1.msra.mxu0 0.0
    %1569 = vmatprep.subr.mxu0 0.0
    %1570 = vmatpush1.msra.mxu0 0.0
    %1571 = vmatprep.subr.mxu0 0.0
    %1572 = vmatpush1.msra.mxu0 0.0
    %1573 = vmatprep.subr.mxu0 0.0
    %1574 = vmatpush1.msra.mxu0 0.0
    %1575 = vmatprep.subr.mxu0 0.0
    %1576 = vmatpush1.msra.mxu0 0.0
    %1577 = vmatprep.subr.mxu0 0.0
    %1578 = vmatpush1.msra.mxu0 0.0
    %1579 = vmatprep.subr.mxu0 0.0
    %1580 = vmatpush1.msra.mxu0 0.0
    %1581 = vmatprep.subr.mxu0 0.0
    %1582 = vmatpush1.msra.mxu0 0.0
    %1583 = vmatprep.subr.mxu0 0.0
    %1584 = vmatpush1.msra.mxu0 0.0
    %1585 = vmatprep.subr.mxu0 0.0
    %1586 = vmatpush1.msra.mxu0 0.0
    %1587 = vmatprep.subr.mxu0 0.0
    %1588 = vmatpush1.msra.mxu0 0.0
    %1589 = vmatprep.subr.mxu0 0.0
    %1590 = vmatpush1.msra.mxu0 0.0
    %1591 = vmatprep.mubr.f32.mxu0 0.0
    %1592 = vmatmul.mubr.f32.gmra.mrb[0].mxu0 %v30
    %v1593 = vpop.f32.mrb[0].mxu0
    %v1594 = vadd.f32 0.0, %v1593
    %v1595 = vpop.f32.mrb[0].mxu0
    %1596 = vmatprep.mubr.f32.mxu0 0.0
    %1597 = vmatmul.mubr.f32.gmra.mrb[0].mxu0 %v33
    %v1598 = vpop.f32.mrb[0].mxu0
    %v1599 = vadd.f32 0.0, %v1598
    %v1600 = vpop.f32.mrb[0].mxu0
    %1601 = vdwg.mxu0
    %1602 = vmatprep.subr.mxu0 0.0
    %1603 = vmatpush1.msra.mxu0 %v1522
    %1604 = vmatprep.subr.mxu0 0.0
    %1605 = vmatpush1.msra.mxu0 0.0
    %1606 = vmatprep.subr.mxu0 0.0
    %1607 = vmatpush1.msra.mxu0 0.0
    %1608 = vmatprep.subr.mxu0 0.0
    %1609 = vmatpush1.msra.mxu0 0.0
    %1610 = vmatprep.subr.mxu0 0.0
    %1611 = vmatpush1.msra.mxu0 0.0
    %1612 = vmatprep.subr.mxu0 0.0
    %1613 = vmatpush1.msra.mxu0 0.0
    %1614 = vmatprep.subr.mxu0 0.0
    %1615 = vmatpush1.msra.mxu0 0.0
    %1616 = vmatprep.subr.mxu0 0.0
    %1617 = vmatpush1.msra.mxu0 0.0
    %1618 = vmatprep.subr.mxu0 0.0
    %1619 = vmatpush1.msra.mxu0 0.0
    %1620 = vmatprep.subr.mxu0 0.0
    %1621 = vmatpush1.msra.mxu0 0.0
    %1622 = vmatprep.subr.mxu0 0.0
    %1623 = vmatpush1.msra.mxu0 0.0
    %1624 = vmatprep.subr.mxu0 0.0
    %1625 = vmatpush1.msra.mxu0 0.0
    %1626 = vmatprep.subr.mxu0 0.0
    %1627 = vmatpush1.msra.mxu0 0.0
    %1628 = vmatprep.subr.mxu0 0.0
    %1629 = vmatpush1.msra.mxu0 0.0
    %1630 = vmatprep.subr.mxu0 0.0
    %1631 = vmatpush1.msra.mxu0 0.0
    %1632 = vmatprep.subr.mxu0 0.0
    %1633 = vmatpush1.msra.mxu0 0.0
    %1634 = vmatprep.subr.mxu0 0.0
    %1635 = vmatpush1.msra.mxu0 0.0
    %1636 = vmatprep.subr.mxu0 0.0
    %1637 = vmatpush1.msra.mxu0 0.0
    %1638 = vmatprep.subr.mxu0 0.0
    %1639 = vmatpush1.msra.mxu0 0.0
    %1640 = vmatprep.subr.mxu0 0.0
    %1641 = vmatpush1.msra.mxu0 0.0
    %1642 = vmatprep.subr.mxu0 0.0
    %1643 = vmatpush1.msra.mxu0 0.0
    %1644 = vmatprep.subr.mxu0 0.0
    %1645 = vmatpush1.msra.mxu0 0.0
    %1646 = vmatprep.subr.mxu0 0.0
    %1647 = vmatpush1.msra.mxu0 0.0
    %1648 = vmatprep.subr.mxu0 0.0
    %1649 = vmatpush1.msra.mxu0 0.0
    %1650 = vmatprep.subr.mxu0 0.0
    %1651 = vmatpush1.msra.mxu0 0.0
    %1652 = vmatprep.subr.mxu0 0.0
    %1653 = vmatpush1.msra.mxu0 0.0
    %1654 = vmatprep.subr.mxu0 0.0
    %1655 = vmatpush1.msra.mxu0 0.0
    %1656 = vmatprep.subr.mxu0 0.0
    %1657 = vmatpush1.msra.mxu0 0.0
    %1658 = vmatprep.subr.mxu0 0.0
    %1659 = vmatpush1.msra.mxu0 0.0
    %1660 = vmatprep.subr.mxu0 0.0
    %1661 = vmatpush1.msra.mxu0 0.0
    %1662 = vmatprep.subr.mxu0 0.0
    %1663 = vmatpush1.msra.mxu0 0.0
    %1664 = vmatprep.subr.mxu0 0.0
    %1665 = vmatpush1.msra.mxu0 0.0
    %1666 = vmatprep.mubr.f32.mxu0 0.0
    %1667 = vmatmul.mubr.f32.gmra.mrb[0].mxu0 %v111
    %v1668 = vpop.f32.mrb[0].mxu0
    %v1669 = vadd.f32 %v1594, %v1668
    %v1670 = vpop.f32.mrb[0].mxu0
    %1671 = vmatprep.mubr.f32.mxu0 0.0
    %1672 = vmatmul.mubr.f32.gmra.mrb[0].mxu0 %v114
    %v1673 = vpop.f32.mrb[0].mxu0
    %v1674 = vadd.f32 %v1599, %v1673
    %v1675 = vpop.f32.mrb[0].mxu0
    %1676 = vdwg.mxu0
    %1677 = vrot.lane.b32.xlu0 %v1522, 124
    %v1678 = vpop.permute.xlu0 %1677
    %1680 = vmatprep.subr.mxu0 0.0
    %1681 = vmatpush1.msra.mxu0 %v1678
    %1682 = vmatprep.subr.mxu0 0.0
    %1683 = vmatpush1.msra.mxu0 0.0
    %1684 = vmatprep.subr.mxu0 0.0
    %1685 = vmatpush1.msra.mxu0 0.0
    %1686 = vmatprep.subr.mxu0 0.0
    %1687 = vmatpush1.msra.mxu0 0.0
    %1688 = vmatprep.subr.mxu0 0.0
    %1689 = vmatpush1.msra.mxu0 0.0
    %1690 = vmatprep.subr.mxu0 0.0
    %1691 = vmatpush1.msra.mxu0 0.0
    %1692 = vmatprep.subr.mxu0 0.0
    %1693 = vmatpush1.msra.mxu0 0.0
    %1694 = vmatprep.subr.mxu0 0.0
    %1695 = vmatpush1.msra.mxu0 0.0
    %1696 = vmatprep.subr.mxu0 0.0
    %1697 = vmatpush1.msra.mxu0 0.0
    %1698 = vmatprep.subr.mxu0 0.0
    %1699 = vmatpush1.msra.mxu0 0.0
    %1700 = vmatprep.subr.mxu0 0.0
    %1701 = vmatpush1.msra.mxu0 0.0
    %1702 = vmatprep.subr.mxu0 0.0
    %1703 = vmatpush1.msra.mxu0 0.0
    %1704 = vmatprep.subr.mxu0 0.0
    %1705 = vmatpush1.msra.mxu0 0.0
    %1706 = vmatprep.subr.mxu0 0.0
    %1707 = vmatpush1.msra.mxu0 0.0
    %1708 = vmatprep.subr.mxu0 0.0
    %1709 = vmatpush1.msra.mxu0 0.0
    %1710 = vmatprep.subr.mxu0 0.0
    %1711 = vmatpush1.msra.mxu0 0.0
    %1712 = vmatprep.subr.mxu0 0.0
    %1713 = vmatpush1.msra.mxu0 0.0
    %1714 = vmatprep.subr.mxu0 0.0
    %1715 = vmatpush1.msra.mxu0 0.0
    %1716 = vmatprep.subr.mxu0 0.0
    %1717 = vmatpush1.msra.mxu0 0.0
    %1718 = vmatprep.subr.mxu0 0.0
    %1719 = vmatpush1.msra.mxu0 0.0
    %1720 = vmatprep.subr.mxu0 0.0
    %1721 = vmatpush1.msra.mxu0 0.0
    %1722 = vmatprep.subr.mxu0 0.0
    %1723 = vmatpush1.msra.mxu0 0.0
    %1724 = vmatprep.subr.mxu0 0.0
    %1725 = vmatpush1.msra.mxu0 0.0
    %1726 = vmatprep.subr.mxu0 0.0
    %1727 = vmatpush1.msra.mxu0 0.0
    %1728 = vmatprep.subr.mxu0 0.0
    %1729 = vmatpush1.msra.mxu0 0.0
    %1730 = vmatprep.subr.mxu0 0.0
    %1731 = vmatpush1.msra.mxu0 0.0
    %1732 = vmatprep.subr.mxu0 0.0
    %1733 = vmatpush1.msra.mxu0 0.0
    %1734 = vmatprep.subr.mxu0 0.0
    %1735 = vmatpush1.msra.mxu0 0.0
    %1736 = vmatprep.subr.mxu0 0.0
    %1737 = vmatpush1.msra.mxu0 0.0
    %1738 = vmatprep.subr.mxu0 0.0
    %1739 = vmatpush1.msra.mxu0 0.0
    %1740 = vmatprep.subr.mxu0 0.0
    %1741 = vmatpush1.msra.mxu0 0.0
    %1742 = vmatprep.subr.mxu0 0.0
    %1743 = vmatpush1.msra.mxu0 0.0
    %1744 = vmatprep.mubr.f32.mxu0 0.0
    %1745 = vmatmul.mubr.f32.gmra.mrb[0].mxu0 %v195
    %v1746 = vpop.f32.mrb[0].mxu0
    %v1747 = vadd.f32 0.0, %v1746
    %v1748 = vpop.f32.mrb[0].mxu0
    %1749 = vmatprep.mubr.f32.mxu0 0.0
    %1750 = vmatmul.mubr.f32.gmra.mrb[0].mxu0 %v198
    %v1751 = vpop.f32.mrb[0].mxu0
    %v1752 = vadd.f32 0.0, %v1751
    %v1753 = vpop.f32.mrb[0].mxu0
    %1754 = vdwg.mxu0
    %v1755 = vadd.f32 %v1669, %v1747
    %v1756 = vadd.f32 %v1674, %v1752
    %v1757 = vadd.f32 %v1755, %v280
    %v1758 = vadd.f32 %v1756, %v285
    %v1759 = vmul.f32 %v1757, 0.2
    %v1760 = vmul.f32 %v1758, 0.2
    %v1761 = vmax.f32 %v1757, %v1759
    %v1762 = vmax.f32 %v1758, %v1760
    %s1763 = scalar_lea.vmem [#allocation2], 96
    %1764 = vst.msk [vmem:[%s1763] sm:$0xff] %vm293, %v1761
    %1765 = vst.msk [vmem:[%s1763 + $0x8] sm:$0xff] %vm293, %v1762
    %s1766 = scalar_lea.vmem %s0, 56
    %v1767 = vld [vmem:[%s1766] sm:$0xff]
    %1769 = vrot.lane.b32.xlu0 %v1767, 126
    %v1770 = vpop.permute.xlu0 %1769
    %1772 = vmatprep.subr.mxu0 0.0
    %1773 = vmatpush1.msra.mxu0 %v1770
    %1774 = vmatprep.subr.mxu0 0.0
    %1775 = vmatpush1.msra.mxu0 0.0
    %1776 = vmatprep.subr.mxu0 0.0
    %1777 = vmatpush1.msra.mxu0 0.0
    %1778 = vmatprep.subr.mxu0 0.0
    %1779 = vmatpush1.msra.mxu0 0.0
    %1780 = vmatprep.subr.mxu0 0.0
    %1781 = vmatpush1.msra.mxu0 0.0
    %1782 = vmatprep.subr.mxu0 0.0
    %1783 = vmatpush1.msra.mxu0 0.0
    %1784 = vmatprep.subr.mxu0 0.0
    %1785 = vmatpush1.msra.mxu0 0.0
    %1786 = vmatprep.subr.mxu0 0.0
    %1787 = vmatpush1.msra.mxu0 0.0
    %1788 = vmatprep.subr.mxu0 0.0
    %1789 = vmatpush1.msra.mxu0 0.0
    %1790 = vmatprep.subr.mxu0 0.0
    %1791 = vmatpush1.msra.mxu0 0.0
    %1792 = vmatprep.subr.mxu0 0.0
    %1793 = vmatpush1.msra.mxu0 0.0
    %1794 = vmatprep.subr.mxu0 0.0
    %1795 = vmatpush1.msra.mxu0 0.0
    %1796 = vmatprep.subr.mxu0 0.0
    %1797 = vmatpush1.msra.mxu0 0.0
    %1798 = vmatprep.subr.mxu0 0.0
    %1799 = vmatpush1.msra.mxu0 0.0
    %1800 = vmatprep.subr.mxu0 0.0
    %1801 = vmatpush1.msra.mxu0 0.0
    %1802 = vmatprep.subr.mxu0 0.0
    %1803 = vmatpush1.msra.mxu0 0.0
    %1804 = vmatprep.subr.mxu0 0.0
    %1805 = vmatpush1.msra.mxu0 0.0
    %1806 = vmatprep.subr.mxu0 0.0
    %1807 = vmatpush1.msra.mxu0 0.0
    %1808 = vmatprep.subr.mxu0 0.0
    %1809 = vmatpush1.msra.mxu0 0.0
    %1810 = vmatprep.subr.mxu0 0.0
    %1811 = vmatpush1.msra.mxu0 0.0
    %1812 = vmatprep.subr.mxu0 0.0
    %1813 = vmatpush1.msra.mxu0 0.0
    %1814 = vmatprep.subr.mxu0 0.0
    %1815 = vmatpush1.msra.mxu0 0.0
    %1816 = vmatprep.subr.mxu0 0.0
    %1817 = vmatpush1.msra.mxu0 0.0
    %1818 = vmatprep.subr.mxu0 0.0
    %1819 = vmatpush1.msra.mxu0 0.0
    %1820 = vmatprep.subr.mxu0 0.0
    %1821 = vmatpush1.msra.mxu0 0.0
    %1822 = vmatprep.subr.mxu0 0.0
    %1823 = vmatpush1.msra.mxu0 0.0
    %1824 = vmatprep.subr.mxu0 0.0
    %1825 = vmatpush1.msra.mxu0 0.0
    %1826 = vmatprep.subr.mxu0 0.0
    %1827 = vmatpush1.msra.mxu0 0.0
    %1828 = vmatprep.subr.mxu0 0.0
    %1829 = vmatpush1.msra.mxu0 0.0
    %1830 = vmatprep.subr.mxu0 0.0
    %1831 = vmatpush1.msra.mxu0 0.0
    %1832 = vmatprep.subr.mxu0 0.0
    %1833 = vmatpush1.msra.mxu0 0.0
    %1834 = vmatprep.subr.mxu0 0.0
    %1835 = vmatpush1.msra.mxu0 0.0
    %1836 = vmatprep.mubr.f32.mxu0 0.0
    %1837 = vmatmul.mubr.f32.gmra.mrb[0].mxu0 %v30
    %v1838 = vpop.f32.mrb[0].mxu0
    %v1839 = vadd.f32 0.0, %v1838
    %v1840 = vpop.f32.mrb[0].mxu0
    %1841 = vmatprep.mubr.f32.mxu0 0.0
    %1842 = vmatmul.mubr.f32.gmra.mrb[0].mxu0 %v33
    %v1843 = vpop.f32.mrb[0].mxu0
    %v1844 = vadd.f32 0.0, %v1843
    %v1845 = vpop.f32.mrb[0].mxu0
    %1846 = vdwg.mxu0
    %1847 = vmatprep.subr.mxu0 0.0
    %1848 = vmatpush1.msra.mxu0 %v1767
    %1849 = vmatprep.subr.mxu0 0.0
    %1850 = vmatpush1.msra.mxu0 0.0
    %1851 = vmatprep.subr.mxu0 0.0
    %1852 = vmatpush1.msra.mxu0 0.0
    %1853 = vmatprep.subr.mxu0 0.0
    %1854 = vmatpush1.msra.mxu0 0.0
    %1855 = vmatprep.subr.mxu0 0.0
    %1856 = vmatpush1.msra.mxu0 0.0
    %1857 = vmatprep.subr.mxu0 0.0
    %1858 = vmatpush1.msra.mxu0 0.0
    %1859 = vmatprep.subr.mxu0 0.0
    %1860 = vmatpush1.msra.mxu0 0.0
    %1861 = vmatprep.subr.mxu0 0.0
    %1862 = vmatpush1.msra.mxu0 0.0
    %1863 = vmatprep.subr.mxu0 0.0
    %1864 = vmatpush1.msra.mxu0 0.0
    %1865 = vmatprep.subr.mxu0 0.0
    %1866 = vmatpush1.msra.mxu0 0.0
    %1867 = vmatprep.subr.mxu0 0.0
    %1868 = vmatpush1.msra.mxu0 0.0
    %1869 = vmatprep.subr.mxu0 0.0
    %1870 = vmatpush1.msra.mxu0 0.0
    %1871 = vmatprep.subr.mxu0 0.0
    %1872 = vmatpush1.msra.mxu0 0.0
    %1873 = vmatprep.subr.mxu0 0.0
    %1874 = vmatpush1.msra.mxu0 0.0
    %1875 = vmatprep.subr.mxu0 0.0
    %1876 = vmatpush1.msra.mxu0 0.0
    %1877 = vmatprep.subr.mxu0 0.0
    %1878 = vmatpush1.msra.mxu0 0.0
    %1879 = vmatprep.subr.mxu0 0.0
    %1880 = vmatpush1.msra.mxu0 0.0
    %1881 = vmatprep.subr.mxu0 0.0
    %1882 = vmatpush1.msra.mxu0 0.0
    %1883 = vmatprep.subr.mxu0 0.0
    %1884 = vmatpush1.msra.mxu0 0.0
    %1885 = vmatprep.subr.mxu0 0.0
    %1886 = vmatpush1.msra.mxu0 0.0
    %1887 = vmatprep.subr.mxu0 0.0
    %1888 = vmatpush1.msra.mxu0 0.0
    %1889 = vmatprep.subr.mxu0 0.0
    %1890 = vmatpush1.msra.mxu0 0.0
    %1891 = vmatprep.subr.mxu0 0.0
    %1892 = vmatpush1.msra.mxu0 0.0
    %1893 = vmatprep.subr.mxu0 0.0
    %1894 = vmatpush1.msra.mxu0 0.0
    %1895 = vmatprep.subr.mxu0 0.0
    %1896 = vmatpush1.msra.mxu0 0.0
    %1897 = vmatprep.subr.mxu0 0.0
    %1898 = vmatpush1.msra.mxu0 0.0
    %1899 = vmatprep.subr.mxu0 0.0
    %1900 = vmatpush1.msra.mxu0 0.0
    %1901 = vmatprep.subr.mxu0 0.0
    %1902 = vmatpush1.msra.mxu0 0.0
    %1903 = vmatprep.subr.mxu0 0.0
    %1904 = vmatpush1.msra.mxu0 0.0
    %1905 = vmatprep.subr.mxu0 0.0
    %1906 = vmatpush1.msra.mxu0 0.0
    %1907 = vmatprep.subr.mxu0 0.0
    %1908 = vmatpush1.msra.mxu0 0.0
    %1909 = vmatprep.subr.mxu0 0.0
    %1910 = vmatpush1.msra.mxu0 0.0
    %1911 = vmatprep.mubr.f32.mxu0 0.0
    %1912 = vmatmul.mubr.f32.gmra.mrb[0].mxu0 %v111
    %v1913 = vpop.f32.mrb[0].mxu0
    %v1914 = vadd.f32 %v1839, %v1913
    %v1915 = vpop.f32.mrb[0].mxu0
    %1916 = vmatprep.mubr.f32.mxu0 0.0
    %1917 = vmatmul.mubr.f32.gmra.mrb[0].mxu0 %v114
    %v1918 = vpop.f32.mrb[0].mxu0
    %v1919 = vadd.f32 %v1844, %v1918
    %v1920 = vpop.f32.mrb[0].mxu0
    %1921 = vdwg.mxu0
    %1922 = vrot.lane.b32.xlu0 %v1767, 124
    %v1923 = vpop.permute.xlu0 %1922
    %1925 = vmatprep.subr.mxu0 0.0
    %1926 = vmatpush1.msra.mxu0 %v1923
    %1927 = vmatprep.subr.mxu0 0.0
    %1928 = vmatpush1.msra.mxu0 0.0
    %1929 = vmatprep.subr.mxu0 0.0
    %1930 = vmatpush1.msra.mxu0 0.0
    %1931 = vmatprep.subr.mxu0 0.0
    %1932 = vmatpush1.msra.mxu0 0.0
    %1933 = vmatprep.subr.mxu0 0.0
    %1934 = vmatpush1.msra.mxu0 0.0
    %1935 = vmatprep.subr.mxu0 0.0
    %1936 = vmatpush1.msra.mxu0 0.0
    %1937 = vmatprep.subr.mxu0 0.0
    %1938 = vmatpush1.msra.mxu0 0.0
    %1939 = vmatprep.subr.mxu0 0.0
    %1940 = vmatpush1.msra.mxu0 0.0
    %1941 = vmatprep.subr.mxu0 0.0
    %1942 = vmatpush1.msra.mxu0 0.0
    %1943 = vmatprep.subr.mxu0 0.0
    %1944 = vmatpush1.msra.mxu0 0.0
    %1945 = vmatprep.subr.mxu0 0.0
    %1946 = vmatpush1.msra.mxu0 0.0
    %1947 = vmatprep.subr.mxu0 0.0
    %1948 = vmatpush1.msra.mxu0 0.0
    %1949 = vmatprep.subr.mxu0 0.0
    %1950 = vmatpush1.msra.mxu0 0.0
    %1951 = vmatprep.subr.mxu0 0.0
    %1952 = vmatpush1.msra.mxu0 0.0
    %1953 = vmatprep.subr.mxu0 0.0
    %1954 = vmatpush1.msra.mxu0 0.0
    %1955 = vmatprep.subr.mxu0 0.0
    %1956 = vmatpush1.msra.mxu0 0.0
    %1957 = vmatprep.subr.mxu0 0.0
    %1958 = vmatpush1.msra.mxu0 0.0
    %1959 = vmatprep.subr.mxu0 0.0
    %1960 = vmatpush1.msra.mxu0 0.0
    %1961 = vmatprep.subr.mxu0 0.0
    %1962 = vmatpush1.msra.mxu0 0.0
    %1963 = vmatprep.subr.mxu0 0.0
    %1964 = vmatpush1.msra.mxu0 0.0
    %1965 = vmatprep.subr.mxu0 0.0
    %1966 = vmatpush1.msra.mxu0 0.0
    %1967 = vmatprep.subr.mxu0 0.0
    %1968 = vmatpush1.msra.mxu0 0.0
    %1969 = vmatprep.subr.mxu0 0.0
    %1970 = vmatpush1.msra.mxu0 0.0
    %1971 = vmatprep.subr.mxu0 0.0
    %1972 = vmatpush1.msra.mxu0 0.0
    %1973 = vmatprep.subr.mxu0 0.0
    %1974 = vmatpush1.msra.mxu0 0.0
    %1975 = vmatprep.subr.mxu0 0.0
    %1976 = vmatpush1.msra.mxu0 0.0
    %1977 = vmatprep.subr.mxu0 0.0
    %1978 = vmatpush1.msra.mxu0 0.0
    %1979 = vmatprep.subr.mxu0 0.0
    %1980 = vmatpush1.msra.mxu0 0.0
    %1981 = vmatprep.subr.mxu0 0.0
    %1982 = vmatpush1.msra.mxu0 0.0
    %1983 = vmatprep.subr.mxu0 0.0
    %1984 = vmatpush1.msra.mxu0 0.0
    %1985 = vmatprep.subr.mxu0 0.0
    %1986 = vmatpush1.msra.mxu0 0.0
    %1987 = vmatprep.subr.mxu0 0.0
    %1988 = vmatpush1.msra.mxu0 0.0
    %1989 = vmatprep.mubr.f32.mxu0 0.0
    %1990 = vmatmul.mubr.f32.gmra.mrb[0].mxu0 %v195
    %v1991 = vpop.f32.mrb[0].mxu0
    %v1992 = vadd.f32 0.0, %v1991
    %v1993 = vpop.f32.mrb[0].mxu0
    %1994 = vmatprep.mubr.f32.mxu0 0.0
    %1995 = vmatmul.mubr.f32.gmra.mrb[0].mxu0 %v198
    %v1996 = vpop.f32.mrb[0].mxu0
    %v1997 = vadd.f32 0.0, %v1996
    %v1998 = vpop.f32.mrb[0].mxu0
    %1999 = vdwg.mxu0
    %v2000 = vadd.f32 %v1914, %v1992
    %v2001 = vadd.f32 %v1919, %v1997
    %v2002 = vadd.f32 %v2000, %v280
    %v2003 = vadd.f32 %v2001, %v285
    %v2004 = vmul.f32 %v2002, 0.2
    %v2005 = vmul.f32 %v2003, 0.2
    %v2006 = vmax.f32 %v2002, %v2004
    %v2007 = vmax.f32 %v2003, %v2005
    %s2008 = scalar_lea.vmem [#allocation2], 112
    %2009 = vst.msk [vmem:[%s2008] sm:$0xff] %vm293, %v2006
    %2010 = vst.msk [vmem:[%s2008 + $0x8] sm:$0xff] %vm293, %v2007
    // Predicated region
    $region14: #{tpu_custom_call.1} parent=1 // pred_check
      _
    $region15: #{tpu_custom_call.1} parent=1 // pred_check_branch
      %2012 = sbr.rel (0) target = $region17
    $region16: #{tpu_custom_call.1} parent=1 // pred_region
      %s2014 = ssub.s32 2048, 2048
      %2015 = vsyncadd [#allocation3], %s2014
      %s2016 = sshll.u32 [#allocation2], 4
      %s2017 = int_to_ptr.vmem [resolvable:$true] %s2016
      %2022 = dma.vmem_to_hbm [thread:$0]  %s2017, 2048, %s3, [#allocation3], 128, 128, 8
    $region17: #{tpu_custom_call.1} parent=1 // pred_fallthru
      _
    // Predicated region
    $region18: #{tpu_custom_call.1} parent=1 // pred_check
      _
    $region19: #{tpu_custom_call.1} parent=1 // pred_check_branch
      %2024 = sbr.rel (0) target = $region21
    $region20: #{tpu_custom_call.1} parent=1 // pred_region
      %2025 = dma.done [#allocation3], 2048
    $region21: #{tpu_custom_call.1} parent=1 // pred_fallthru
      _
    %2026 = vsyncpa [#allocation3], 1

</llo_original>
